<compile_context>
chip_gen: v7x
topology: tpu7x:2x2x1
jax: 0.10.0
libtpu: 0.0.40
codegen_flags: <defaults>
</compile_context>

<pallas_src>
import math

import jax
import jax.numpy as jnp
from jax.experimental import pallas as pl
from jax.experimental.pallas import tpu as pltpu

# ---- synthetic "roberta-like" config (scaled down for a small runnable example) ----
VOCAB = 100
MAX_POS = 64
HIDDEN = 32
N_HEADS = 4
HEAD_DIM = HIDDEN // N_HEADS
FFN = 64
N_LAYERS = 2
NUM_TASK = 7
LANE_PAD = 128          # classifier output lane-padded to a full 128-lane store
SEQ = 8
BATCH = 2
TEMPERATURE = 2.0
LN_EPS = 1e-5

assert SEQ & (SEQ - 1) == 0, "block-diagonal bias trick assumes power-of-two SEQ"


def _layer_norm(x, g, b):
    mu = jnp.mean(x, axis=-1, keepdims=True)
    var = jnp.mean((x - mu) ** 2, axis=-1, keepdims=True)
    return (x - mu) * jax.lax.rsqrt(var + LN_EPS) * g + b


# --------------------------- fused Pallas kernel ---------------------------
#
# grid axis 0 = encoder layer (sequential carry through VMEM scratch -> "arbitrary").
# All inputs use constant index maps (full blocks), so each is DMA'd exactly once; the
# stacked (L, ...) weight slabs are indexed by the layer id inside the kernel.

def fused_router_kernel(
        x_in_ref, mask_ref,
        wqkv_ref, bqkv_ref, wo_ref, bo_ref,
        w1_ref, b1_ref, w2_ref, b2_ref, ln_ref,
        wc_ref, bc_ref,
        logits_ref,
        x_sc):
    layer = pl.program_id(0)
    BS = BATCH * SEQ

    # Layer 0: pull the embedded activations into the VMEM-resident scratch.
    @pl.when(layer == 0)
    def _():
        x_sc[...] = x_in_ref[...]

    x = x_sc[...]                                   # (B*S, H) fp32, resident across layers
    xb = x.astype(jnp.bfloat16)

    # ---- additive attention bias, built in-kernel (no (B*S)^2 HBM fetch) ----
    # block-diagonal over batch (batch folded into the token axis) AND key-padding mask.
    ri = jax.lax.broadcasted_iota(jnp.int32, (BS, BS), 0)
    ci = jax.lax.broadcasted_iota(jnp.int32, (BS, BS), 1)
    same_batch = ((ri ^ ci) & ~(SEQ - 1)) == 0      # row//SEQ == col//SEQ (SEQ = 2^k)
    keep = same_batch & (mask_ref[...] > 0.5)       # (B*S, B*S) & (1, B*S) -> broadcast
    bias = jnp.where(keep, 0.0, -1e9).astype(jnp.float32)

    # ---- fused QKV projection: one (B*S, H) @ (H, 3H) GEMM, static q/k/v slices ----
    qkv = jnp.dot(xb, wqkv_ref[layer], preferred_element_type=jnp.float32) + bqkv_ref[layer]
    q = qkv[:, 0:HIDDEN]
    k = qkv[:, HIDDEN:2 * HIDDEN]
    v = qkv[:, 2 * HIDDEN:3 * HIDDEN]

    wo_l = wo_ref[layer]                            # (H, H) bf16
    scale = 1.0 / math.sqrt(HEAD_DIM)
    contract_last = (((1,), (1,)), ((), ()))        # q·k contraction, no transpose of k
    attn_out = None
    # TODO(synk): head-batched einsum once HEAD_DIM/N_HEADS are real-sized.
    for h in range(N_HEADS):                        # static unroll over heads
        lo = h * HEAD_DIM
        qh = q[:, lo:lo + HEAD_DIM].astype(jnp.bfloat16)
        kh = k[:, lo:lo + HEAD_DIM].astype(jnp.bfloat16)
        vh = v[:, lo:lo + HEAD_DIM].astype(jnp.bfloat16)
        s = jax.lax.dot_general(qh, kh, contract_last,
                                preferred_element_type=jnp.float32) * scale + bias
        s = s - jnp.max(s, axis=-1, keepdims=True)
        p = jnp.exp(s)
        p = p * pl.reciprocal(jnp.sum(p, axis=-1, keepdims=True), approx=True)
        ctx_h = jnp.dot(p.astype(jnp.bfloat16), vh, preferred_element_type=jnp.float32)
        # fold per-head context straight into the output projection (no ctx scratch)
        contrib = jnp.dot(ctx_h.astype(jnp.bfloat16), wo_l[lo:lo + HEAD_DIM, :],
                          preferred_element_type=jnp.float32)
        attn_out = contrib if attn_out is None else attn_out + contrib
    attn_out = attn_out + bo_ref[layer]

    ln_l = ln_ref[layer]                            # (4, H): ln1_g, ln1_b, ln2_g, ln2_b
    h1 = _layer_norm(x + attn_out, ln_l[0:1, :], ln_l[1:2, :])

    # ---- feed-forward ----
    f = jnp.dot(h1.astype(jnp.bfloat16), w1_ref[layer],
                preferred_element_type=jnp.float32) + b1_ref[layer]
    f = jax.nn.gelu(f, approximate=True)
    f = jnp.dot(f.astype(jnp.bfloat16), w2_ref[layer],
                preferred_element_type=jnp.float32) + b2_ref[layer]
    x_new = _layer_norm(h1 + f, ln_l[2:3, :], ln_l[3:4, :])
    x_sc[...] = x_new                               # carry to next layer (stays in VMEM)

    # ---- fused classifier epilogue: CLS -> Linear -> /temperature ----
    @pl.when(layer == pl.num_programs(0) - 1)
    def _():
        # one-hot (B, B*S) selection of each batch element's CLS row (no concat/slices)
        r = jax.lax.broadcasted_iota(jnp.int32, (BATCH, BS), 0)
        c = jax.lax.broadcasted_iota(jnp.int32, (BATCH, BS), 1)
        sel = (c == r * SEQ).astype(jnp.bfloat16)
        cls = jnp.dot(sel, x_new.astype(jnp.bfloat16), preferred_element_type=jnp.float32)
        logits = jnp.dot(cls.astype(jnp.bfloat16), wc_ref[...],
                         preferred_element_type=jnp.float32) + bc_ref[...]
        logits_ref[...] = logits * (1.0 / TEMPERATURE)   # (B, 128) lane-dense store


# --------------------------- wrapper ---------------------------

def _resident_spec(arr):
    nd = arr.ndim
    return pl.BlockSpec(arr.shape, lambda l, _nd=nd: (0,) * _nd)


def router_classifier_forward(params, input_ids, attention_mask):
    B, S = input_ids.shape

    # ---- embedding gathers + embedding layernorm (plain-JAX glue) ----
    x = params['word_emb'][input_ids] + params['pos_emb'][jnp.arange(S)][None, :, :]
    x = _layer_norm(x, params['emb_ln_g'], params['emb_ln_b'])
    x2 = x.reshape(B * S, HIDDEN).astype(jnp.float32)

    # key-padding mask as a single (1, B*S) row; the full bias is rebuilt in-kernel
    mask_row = attention_mask.astype(jnp.float32).reshape(1, B * S)

    bf = lambda a: a.astype(jnp.bfloat16)
    # fused QKV weight/bias, packed layernorm params (leading axis = layer)
    wqkv = bf(jnp.concatenate([params['wq'], params['wk'], params['wv']], axis=-1))   # (L,H,3H)
    bqkv = jnp.concatenate([params['bq'], params['bk'], params['bv']], axis=-1)       # (L,1,3H)
    ln = jnp.concatenate([params['ln1_g'], params['ln1_b'],
                          params['ln2_g'], params['ln2_b']], axis=1)                  # (L,4,H)

    # classifier head, lane-padded to 128 output columns
    wc_pad = jnp.zeros((HIDDEN, LANE_PAD), jnp.bfloat16)
    wc_pad = wc_pad.at[:, :NUM_TASK].set(params['wc'].astype(jnp.bfloat16))
    bc_pad = jnp.zeros((1, LANE_PAD), jnp.float32).at[:, :NUM_TASK].set(params['bc'])

    operands = [x2, mask_row,
                wqkv, bqkv, bf(params['wo']), params['bo'],
                bf(params['w1']), params['b1'], bf(params['w2']), params['b2'],
                ln, wc_pad, bc_pad]

    logits_pad = pl.pallas_call(
        fused_router_kernel,
        out_shape=jax.ShapeDtypeStruct((B, LANE_PAD), jnp.float32),
        grid=(N_LAYERS,),
        in_specs=[_resident_spec(a) for a in operands],
        out_specs=pl.BlockSpec((B, LANE_PAD), lambda l: (0, 0)),
        scratch_shapes=[pltpu.VMEM((B * S, HIDDEN), jnp.float32)],   # resident activations
        compiler_params=pltpu.CompilerParams(
            dimension_semantics=("arbitrary",)),     # layer axis carries state via scratch
    )(*operands)

    return logits_pad[:, :NUM_TASK]


# --------------------------- params & reference ---------------------------

def init_params(key):
    keys = jax.random.split(key, 16)
    L = N_LAYERS

    def dense(k, shape):
        return (0.02 * jax.random.normal(k, shape)).astype(jnp.float32)

    return {
        'word_emb': dense(keys[0], (VOCAB, HIDDEN)),
        'pos_emb': dense(keys[1], (MAX_POS, HIDDEN)),
        'emb_ln_g': jnp.ones((1, 1, HIDDEN), jnp.float32),
        'emb_ln_b': jnp.zeros((1, 1, HIDDEN), jnp.float32),
        'wc': dense(keys[2], (HIDDEN, NUM_TASK)),
        'bc': jnp.zeros((1, NUM_TASK), jnp.float32),
        # stacked per-layer encoder weights, leading axis = layer
        'wq': dense(keys[3], (L, HIDDEN, HIDDEN)), 'bq': jnp.zeros((L, 1, HIDDEN), jnp.float32),
        'wk': dense(keys[4], (L, HIDDEN, HIDDEN)), 'bk': jnp.zeros((L, 1, HIDDEN), jnp.float32),
        'wv': dense(keys[5], (L, HIDDEN, HIDDEN)), 'bv': jnp.zeros((L, 1, HIDDEN), jnp.float32),
        'wo': dense(keys[6], (L, HIDDEN, HIDDEN)), 'bo': jnp.zeros((L, 1, HIDDEN), jnp.float32),
        'ln1_g': jnp.ones((L, 1, HIDDEN), jnp.float32), 'ln1_b': jnp.zeros((L, 1, HIDDEN), jnp.float32),
        'w1': dense(keys[7], (L, HIDDEN, FFN)), 'b1': jnp.zeros((L, 1, FFN), jnp.float32),
        'w2': dense(keys[8], (L, FFN, HIDDEN)), 'b2': jnp.zeros((L, 1, HIDDEN), jnp.float32),
        'ln2_g': jnp.ones((L, 1, HIDDEN), jnp.float32), 'ln2_b': jnp.zeros((L, 1, HIDDEN), jnp.float32),
    }


def reference_forward(params, input_ids, attention_mask):
    hp = jax.lax.Precision.HIGHEST
    B, S = input_ids.shape
    x = params['word_emb'][input_ids] + params['pos_emb'][jnp.arange(S)][None, :, :]
    x = _layer_norm(x, params['emb_ln_g'], params['emb_ln_b'])
    kbias = (1.0 - attention_mask.astype(jnp.float32))[:, None, None, :] * -1e9
    for i in range(N_LAYERS):
        q = jnp.matmul(x, params['wq'][i], precision=hp) + params['bq'][i]
        k = jnp.matmul(x, params['wk'][i], precision=hp) + params['bk'][i]
        v = jnp.matmul(x, params['wv'][i], precision=hp) + params['bv'][i]
        q = q.reshape(B, S, N_HEADS, HEAD_DIM).transpose(0, 2, 1, 3)
        k = k.reshape(B, S, N_HEADS, HEAD_DIM).transpose(0, 2, 1, 3)
        v = v.reshape(B, S, N_HEADS, HEAD_DIM).transpose(0, 2, 1, 3)
        s = jnp.einsum('bhqd,bhkd->bhqk', q, k, precision=hp) / math.sqrt(HEAD_DIM) + kbias
        p = jax.nn.softmax(s, axis=-1)
        ctx = jnp.einsum('bhqk,bhkd->bhqd', p, v, precision=hp)
        ctx = ctx.transpose(0, 2, 1, 3).reshape(B, S, HIDDEN)
        h1 = _layer_norm(x + jnp.matmul(ctx, params['wo'][i], precision=hp) + params['bo'][i],
                         params['ln1_g'][i], params['ln1_b'][i])
        f = jax.nn.gelu(jnp.matmul(h1, params['w1'][i], precision=hp) + params['b1'][i],
                        approximate=True)
        x = _layer_norm(h1 + jnp.matmul(f, params['w2'][i], precision=hp) + params['b2'][i],
                        params['ln2_g'][i], params['ln2_b'][i])
    cls = x[:, 0, :]
    logits = jnp.matmul(cls, params['wc'], precision=hp) + params['bc']
    return logits / TEMPERATURE


# --------------------------- main ---------------------------

if __name__ == "__main__":
    key = jax.random.PRNGKey(0)
    pkey, ikey = jax.random.split(key)
    params = init_params(pkey)

    input_ids = jax.random.randint(ikey, (BATCH, SEQ), 0, VOCAB, dtype=jnp.int32)
    attention_mask = jnp.array([[1] * SEQ, [1] * (SEQ - 2) + [0, 0]], dtype=jnp.int32)

    logits = jax.jit(router_classifier_forward)(params, input_ids, attention_mask)
    logits = jax.block_until_ready(logits)

    assert logits.shape == (BATCH, NUM_TASK)
    ref = reference_forward(params, input_ids, attention_mask)
    # bf16 MXU operands (incl. attention matmuls) + approximate softmax reciprocal
    assert jnp.allclose(logits, ref, atol=5e-3, rtol=5e-3), (logits, ref)

    print("KERNEL_OK")
</pallas_src>

<mosaic_0001>
module attributes {stable_mosaic.version = 11 : i64} {
  func.func @fused_router_kernel(%arg0: i32, %arg1: memref<16x32xf32, #tpu.memory_space<vmem>>, %arg2: memref<1x16xf32, #tpu.memory_space<vmem>>, %arg3: memref<2x32x96xbf16, #tpu.memory_space<vmem>>, %arg4: memref<2x1x96xf32, #tpu.memory_space<vmem>>, %arg5: memref<2x32x32xbf16, #tpu.memory_space<vmem>>, %arg6: memref<2x1x32xf32, #tpu.memory_space<vmem>>, %arg7: memref<2x32x64xbf16, #tpu.memory_space<vmem>>, %arg8: memref<2x1x64xf32, #tpu.memory_space<vmem>>, %arg9: memref<2x64x32xbf16, #tpu.memory_space<vmem>>, %arg10: memref<2x1x32xf32, #tpu.memory_space<vmem>>, %arg11: memref<2x4x32xf32, #tpu.memory_space<vmem>>, %arg12: memref<32x128xbf16, #tpu.memory_space<vmem>>, %arg13: memref<1x128xf32, #tpu.memory_space<vmem>>, %arg14: memref<2x128xf32, #tpu.memory_space<vmem>>, %arg15: memref<16x32xf32, #tpu.memory_space<vmem>>) attributes {dimension_semantics = [#tpu.dimension_semantics<arbitrary>], iteration_bounds = array<i64: 2>, scalar_prefetch = 0 : i64, scratch_operands = 1 : i64, tpu.core_type = #tpu.core_type<tc>, window_params = [{pipeline_mode = #tpu.pipeline_mode<synchronous>, transform_indices = @transform_0, window_bounds = array<i64: 16, 32>}, {pipeline_mode = #tpu.pipeline_mode<synchronous>, transform_indices = @transform_1, window_bounds = array<i64: 1, 16>}, {pipeline_mode = #tpu.pipeline_mode<synchronous>, transform_indices = @transform_2, window_bounds = array<i64: 2, 32, 96>}, {pipeline_mode = #tpu.pipeline_mode<synchronous>, transform_indices = @transform_3, window_bounds = array<i64: 2, 1, 96>}, {pipeline_mode = #tpu.pipeline_mode<synchronous>, transform_indices = @transform_4, window_bounds = array<i64: 2, 32, 32>}, {pipeline_mode = #tpu.pipeline_mode<synchronous>, transform_indices = @transform_5, window_bounds = array<i64: 2, 1, 32>}, {pipeline_mode = #tpu.pipeline_mode<synchronous>, transform_indices = @transform_6, window_bounds = array<i64: 2, 32, 64>}, {pipeline_mode = #tpu.pipeline_mode<synchronous>, transform_indices = @transform_7, window_bounds = array<i64: 2, 1, 64>}, {pipeline_mode = #tpu.pipeline_mode<synchronous>, transform_indices = @transform_8, window_bounds = array<i64: 2, 64, 32>}, {pipeline_mode = #tpu.pipeline_mode<synchronous>, transform_indices = @transform_9, window_bounds = array<i64: 2, 1, 32>}, {pipeline_mode = #tpu.pipeline_mode<synchronous>, transform_indices = @transform_10, window_bounds = array<i64: 2, 4, 32>}, {pipeline_mode = #tpu.pipeline_mode<synchronous>, transform_indices = @transform_11, window_bounds = array<i64: 32, 128>}, {pipeline_mode = #tpu.pipeline_mode<synchronous>, transform_indices = @transform_12, window_bounds = array<i64: 1, 128>}, {pipeline_mode = #tpu.pipeline_mode<synchronous>, transform_indices = @transform_13, window_bounds = array<i64: 2, 128>}]} {
    %c0_i32 = arith.constant 0 : i32
    %0 = arith.cmpi eq, %arg0, %c0_i32 : i32
    %1 = arith.extui %0 : i1 to i32
    %c0_i32_0 = arith.constant 0 : i32
    %2 = arith.cmpi ne, %1, %c0_i32_0 : i32
    scf.if %2 {
      %c0_69 = arith.constant 0 : index
      %c0_70 = arith.constant 0 : index
      %233 = vector.load %arg1[%c0_69, %c0_70] : memref<16x32xf32, #tpu.memory_space<vmem>>, vector<16x32xf32>
      %c0_71 = arith.constant 0 : index
      %c0_72 = arith.constant 0 : index
      %234 = vector.load %arg15[%c0_71, %c0_72] : memref<16x32xf32, #tpu.memory_space<vmem>>, vector<16x32xf32>
      tpu.vector_store %arg15[%c0_71, %c0_72], %233 {strides = array<i32>} : memref<16x32xf32, #tpu.memory_space<vmem>>, vector<16x32xf32>,
    } else {
    }
    %c0 = arith.constant 0 : index
    %c0_1 = arith.constant 0 : index
    %3 = vector.load %arg15[%c0, %c0_1] : memref<16x32xf32, #tpu.memory_space<vmem>>, vector<16x32xf32>
    %4 = arith.truncf %3 : vector<16x32xf32> to vector<16x32xbf16>
    %5 = tpu.iota {dimensions = array<i32: 0>} : vector<16x16xi32>
    %6 = tpu.iota {dimensions = array<i32: 1>} : vector<16x16xi32>
    %7 = arith.xori %5, %6 : vector<16x16xi32>
    %c-8_i32 = arith.constant -8 : i32
    %8 = vector.broadcast %c-8_i32 : i32 to vector<16x16xi32>
    %9 = arith.andi %7, %8 : vector<16x16xi32>
    %c0_i32_2 = arith.constant 0 : i32
    %10 = vector.broadcast %c0_i32_2 : i32 to vector<16x16xi32>
    %11 = arith.cmpi eq, %9, %10 : vector<16x16xi32>
    %c0_3 = arith.constant 0 : index
    %c0_4 = arith.constant 0 : index
    %12 = vector.load %arg2[%c0_3, %c0_4] : memref<1x16xf32, #tpu.memory_space<vmem>>, vector<1x16xf32>
    %cst = arith.constant 5.000000e-01 : f32
    %13 = vector.broadcast %cst : f32 to vector<1x16xf32>
    %14 = arith.cmpf ogt, %12, %13 : vector<1x16xf32>
    %15 = vector.broadcast %14 : vector<1x16xi1> to vector<16x16xi1>
    %16 = arith.andi %11, %15 : vector<16x16xi1>
    %cst_5 = arith.constant 0.000000e+00 : f32
    %cst_6 = arith.constant -1.000000e+09 : f32
    %17 = vector.broadcast %cst_5 : f32 to vector<16x16xf32>
    %18 = vector.broadcast %cst_6 : f32 to vector<16x16xf32>
    %19 = arith.select %16, %17, %18 : vector<16x16xi1>, vector<16x16xf32>
    %20 = arith.index_cast %arg0 : i32 to index
    %c0_7 = arith.constant 0 : index
    %c0_8 = arith.constant 0 : index
    %21 = vector.load %arg3[%20, %c0_7, %c0_8] : memref<2x32x96xbf16, #tpu.memory_space<vmem>>, vector<1x32x96xbf16>
    %22 = vector.shape_cast %21 : vector<1x32x96xbf16> to vector<32x96xbf16>
    %cst_9 = arith.constant dense<0.000000e+00> : vector<16x96xf32>
    %23 = tpu.matmul %4, %22, %cst_9 {dimension_numbers = #tpu.dot_dimension_numbers<[1], [0], [0], [1], [0, 0, 1, 1], [], []>} : vector<16x32xbf16>, vector<32x96xbf16>, vector<16x96xf32> -> vector<16x96xf32>
    %24 = arith.index_cast %arg0 : i32 to index
    %c0_10 = arith.constant 0 : index
    %c0_11 = arith.constant 0 : index
    %25 = vector.load %arg4[%24, %c0_10, %c0_11] : memref<2x1x96xf32, #tpu.memory_space<vmem>>, vector<1x1x96xf32>
    %26 = vector.shape_cast %25 : vector<1x1x96xf32> to vector<1x96xf32>
    %27 = vector.broadcast %26 : vector<1x96xf32> to vector<16x96xf32>
    %28 = arith.addf %23, %27 : vector<16x96xf32>
    %29 = vector.extract_strided_slice %28 {offsets = [0, 0], sizes = [16, 32], strides = [1, 1]} : vector<16x96xf32> to vector<16x32xf32>
    %30 = vector.extract_strided_slice %28 {offsets = [0, 32], sizes = [16, 32], strides = [1, 1]} : vector<16x96xf32> to vector<16x32xf32>
    %31 = vector.extract_strided_slice %28 {offsets = [0, 64], sizes = [16, 32], strides = [1, 1]} : vector<16x96xf32> to vector<16x32xf32>
    %32 = arith.index_cast %arg0 : i32 to index
    %c0_12 = arith.constant 0 : index
    %c0_13 = arith.constant 0 : index
    %33 = vector.load %arg5[%32, %c0_12, %c0_13] : memref<2x32x32xbf16, #tpu.memory_space<vmem>>, vector<1x32x32xbf16>
    %34 = vector.shape_cast %33 : vector<1x32x32xbf16> to vector<32x32xbf16>
    %35 = vector.extract_strided_slice %29 {offsets = [0, 0], sizes = [16, 8], strides = [1, 1]} : vector<16x32xf32> to vector<16x8xf32>
    %36 = arith.truncf %35 : vector<16x8xf32> to vector<16x8xbf16>
    %37 = vector.extract_strided_slice %30 {offsets = [0, 0], sizes = [16, 8], strides = [1, 1]} : vector<16x32xf32> to vector<16x8xf32>
    %38 = arith.truncf %37 : vector<16x8xf32> to vector<16x8xbf16>
    %39 = vector.extract_strided_slice %31 {offsets = [0, 0], sizes = [16, 8], strides = [1, 1]} : vector<16x32xf32> to vector<16x8xf32>
    %40 = arith.truncf %39 : vector<16x8xf32> to vector<16x8xbf16>
    %cst_14 = arith.constant dense<0.000000e+00> : vector<16x16xf32>
    %41 = tpu.matmul %36, %38, %cst_14 {dimension_numbers = #tpu.dot_dimension_numbers<[1], [1], [0], [0], [0, 0, 1, 0], [], []>} : vector<16x8xbf16>, vector<16x8xbf16>, vector<16x16xf32> -> vector<16x16xf32>
    %cst_15 = arith.constant 0.353553385 : f32
    %42 = vector.broadcast %cst_15 : f32 to vector<16x16xf32>
    %43 = arith.mulf %41, %42 : vector<16x16xf32>
    %44 = arith.addf %43, %19 : vector<16x16xf32>
    %cst_16 = arith.constant dense<0xFF800000> : vector<16xf32>
    %45 = vector.multi_reduction <maximumf>, %44, %cst_16 [1] : vector<16x16xf32> to vector<16xf32>
    %46 = vector.shape_cast %45 : vector<16xf32> to vector<16x1xf32>
    %47 = vector.broadcast %46 : vector<16x1xf32> to vector<16x16xf32>
    %48 = arith.subf %44, %47 : vector<16x16xf32>
    %49 = math.exp %48 : vector<16x16xf32>
    %cst_17 = arith.constant dense<0.000000e+00> : vector<16xf32>
    %50 = vector.multi_reduction <add>, %49, %cst_17 [1] : vector<16x16xf32> to vector<16xf32>
    %51 = vector.shape_cast %50 : vector<16xf32> to vector<16x1xf32>
    %52 = tpu.reciprocal %51 {approx = true} : vector<16x1xf32> -> vector<16x1xf32>
    %53 = vector.broadcast %52 : vector<16x1xf32> to vector<16x16xf32>
    %54 = arith.mulf %49, %53 : vector<16x16xf32>
    %55 = arith.truncf %54 : vector<16x16xf32> to vector<16x16xbf16>
    %cst_18 = arith.constant dense<0.000000e+00> : vector<16x8xf32>
    %56 = tpu.matmul %55, %40, %cst_18 {dimension_numbers = #tpu.dot_dimension_numbers<[1], [0], [0], [1], [0, 0, 1, 1], [], []>} : vector<16x16xbf16>, vector<16x8xbf16>, vector<16x8xf32> -> vector<16x8xf32>
    %57 = arith.truncf %56 : vector<16x8xf32> to vector<16x8xbf16>
    %58 = vector.extract_strided_slice %34 {offsets = [0, 0], sizes = [8, 32], strides = [1, 1]} : vector<32x32xbf16> to vector<8x32xbf16>
    %cst_19 = arith.constant dense<0.000000e+00> : vector<16x32xf32>
    %59 = tpu.matmul %57, %58, %cst_19 {dimension_numbers = #tpu.dot_dimension_numbers<[1], [0], [0], [1], [0, 0, 1, 1], [], []>} : vector<16x8xbf16>, vector<8x32xbf16>, vector<16x32xf32> -> vector<16x32xf32>
    %60 = vector.extract_strided_slice %29 {offsets = [0, 8], sizes = [16, 8], strides = [1, 1]} : vector<16x32xf32> to vector<16x8xf32>
    %61 = arith.truncf %60 : vector<16x8xf32> to vector<16x8xbf16>
    %62 = vector.extract_strided_slice %30 {offsets = [0, 8], sizes = [16, 8], strides = [1, 1]} : vector<16x32xf32> to vector<16x8xf32>
    %63 = arith.truncf %62 : vector<16x8xf32> to vector<16x8xbf16>
    %64 = vector.extract_strided_slice %31 {offsets = [0, 8], sizes = [16, 8], strides = [1, 1]} : vector<16x32xf32> to vector<16x8xf32>
    %65 = arith.truncf %64 : vector<16x8xf32> to vector<16x8xbf16>
    %cst_20 = arith.constant dense<0.000000e+00> : vector<16x16xf32>
    %66 = tpu.matmul %61, %63, %cst_20 {dimension_numbers = #tpu.dot_dimension_numbers<[1], [1], [0], [0], [0, 0, 1, 0], [], []>} : vector<16x8xbf16>, vector<16x8xbf16>, vector<16x16xf32> -> vector<16x16xf32>
    %cst_21 = arith.constant 0.353553385 : f32
    %67 = vector.broadcast %cst_21 : f32 to vector<16x16xf32>
    %68 = arith.mulf %66, %67 : vector<16x16xf32>
    %69 = arith.addf %68, %19 : vector<16x16xf32>
    %cst_22 = arith.constant dense<0xFF800000> : vector<16xf32>
    %70 = vector.multi_reduction <maximumf>, %69, %cst_22 [1] : vector<16x16xf32> to vector<16xf32>
    %71 = vector.shape_cast %70 : vector<16xf32> to vector<16x1xf32>
    %72 = vector.broadcast %71 : vector<16x1xf32> to vector<16x16xf32>
    %73 = arith.subf %69, %72 : vector<16x16xf32>
    %74 = math.exp %73 : vector<16x16xf32>
    %cst_23 = arith.constant dense<0.000000e+00> : vector<16xf32>
    %75 = vector.multi_reduction <add>, %74, %cst_23 [1] : vector<16x16xf32> to vector<16xf32>
    %76 = vector.shape_cast %75 : vector<16xf32> to vector<16x1xf32>
    %77 = tpu.reciprocal %76 {approx = true} : vector<16x1xf32> -> vector<16x1xf32>
    %78 = vector.broadcast %77 : vector<16x1xf32> to vector<16x16xf32>
    %79 = arith.mulf %74, %78 : vector<16x16xf32>
    %80 = arith.truncf %79 : vector<16x16xf32> to vector<16x16xbf16>
    %cst_24 = arith.constant dense<0.000000e+00> : vector<16x8xf32>
    %81 = tpu.matmul %80, %65, %cst_24 {dimension_numbers = #tpu.dot_dimension_numbers<[1], [0], [0], [1], [0, 0, 1, 1], [], []>} : vector<16x16xbf16>, vector<16x8xbf16>, vector<16x8xf32> -> vector<16x8xf32>
    %82 = arith.truncf %81 : vector<16x8xf32> to vector<16x8xbf16>
    %83 = vector.extract_strided_slice %34 {offsets = [8, 0], sizes = [8, 32], strides = [1, 1]} : vector<32x32xbf16> to vector<8x32xbf16>
    %cst_25 = arith.constant dense<0.000000e+00> : vector<16x32xf32>
    %84 = tpu.matmul %82, %83, %cst_25 {dimension_numbers = #tpu.dot_dimension_numbers<[1], [0], [0], [1], [0, 0, 1, 1], [], []>} : vector<16x8xbf16>, vector<8x32xbf16>, vector<16x32xf32> -> vector<16x32xf32>
    %85 = arith.addf %59, %84 : vector<16x32xf32>
    %86 = vector.extract_strided_slice %29 {offsets = [0, 16], sizes = [16, 8], strides = [1, 1]} : vector<16x32xf32> to vector<16x8xf32>
    %87 = arith.truncf %86 : vector<16x8xf32> to vector<16x8xbf16>
    %88 = vector.extract_strided_slice %30 {offsets = [0, 16], sizes = [16, 8], strides = [1, 1]} : vector<16x32xf32> to vector<16x8xf32>
    %89 = arith.truncf %88 : vector<16x8xf32> to vector<16x8xbf16>
    %90 = vector.extract_strided_slice %31 {offsets = [0, 16], sizes = [16, 8], strides = [1, 1]} : vector<16x32xf32> to vector<16x8xf32>
    %91 = arith.truncf %90 : vector<16x8xf32> to vector<16x8xbf16>
    %cst_26 = arith.constant dense<0.000000e+00> : vector<16x16xf32>
    %92 = tpu.matmul %87, %89, %cst_26 {dimension_numbers = #tpu.dot_dimension_numbers<[1], [1], [0], [0], [0, 0, 1, 0], [], []>} : vector<16x8xbf16>, vector<16x8xbf16>, vector<16x16xf32> -> vector<16x16xf32>
    %cst_27 = arith.constant 0.353553385 : f32
    %93 = vector.broadcast %cst_27 : f32 to vector<16x16xf32>
    %94 = arith.mulf %92, %93 : vector<16x16xf32>
    %95 = arith.addf %94, %19 : vector<16x16xf32>
    %cst_28 = arith.constant dense<0xFF800000> : vector<16xf32>
    %96 = vector.multi_reduction <maximumf>, %95, %cst_28 [1] : vector<16x16xf32> to vector<16xf32>
    %97 = vector.shape_cast %96 : vector<16xf32> to vector<16x1xf32>
    %98 = vector.broadcast %97 : vector<16x1xf32> to vector<16x16xf32>
    %99 = arith.subf %95, %98 : vector<16x16xf32>
    %100 = math.exp %99 : vector<16x16xf32>
    %cst_29 = arith.constant dense<0.000000e+00> : vector<16xf32>
    %101 = vector.multi_reduction <add>, %100, %cst_29 [1] : vector<16x16xf32> to vector<16xf32>
    %102 = vector.shape_cast %101 : vector<16xf32> to vector<16x1xf32>
    %103 = tpu.reciprocal %102 {approx = true} : vector<16x1xf32> -> vector<16x1xf32>
    %104 = vector.broadcast %103 : vector<16x1xf32> to vector<16x16xf32>
    %105 = arith.mulf %100, %104 : vector<16x16xf32>
    %106 = arith.truncf %105 : vector<16x16xf32> to vector<16x16xbf16>
    %cst_30 = arith.constant dense<0.000000e+00> : vector<16x8xf32>
    %107 = tpu.matmul %106, %91, %cst_30 {dimension_numbers = #tpu.dot_dimension_numbers<[1], [0], [0], [1], [0, 0, 1, 1], [], []>} : vector<16x16xbf16>, vector<16x8xbf16>, vector<16x8xf32> -> vector<16x8xf32>
    %108 = arith.truncf %107 : vector<16x8xf32> to vector<16x8xbf16>
    %109 = vector.extract_strided_slice %34 {offsets = [16, 0], sizes = [8, 32], strides = [1, 1]} : vector<32x32xbf16> to vector<8x32xbf16>
    %cst_31 = arith.constant dense<0.000000e+00> : vector<16x32xf32>
    %110 = tpu.matmul %108, %109, %cst_31 {dimension_numbers = #tpu.dot_dimension_numbers<[1], [0], [0], [1], [0, 0, 1, 1], [], []>} : vector<16x8xbf16>, vector<8x32xbf16>, vector<16x32xf32> -> vector<16x32xf32>
    %111 = arith.addf %85, %110 : vector<16x32xf32>
    %112 = vector.extract_strided_slice %29 {offsets = [0, 24], sizes = [16, 8], strides = [1, 1]} : vector<16x32xf32> to vector<16x8xf32>
    %113 = arith.truncf %112 : vector<16x8xf32> to vector<16x8xbf16>
    %114 = vector.extract_strided_slice %30 {offsets = [0, 24], sizes = [16, 8], strides = [1, 1]} : vector<16x32xf32> to vector<16x8xf32>
    %115 = arith.truncf %114 : vector<16x8xf32> to vector<16x8xbf16>
    %116 = vector.extract_strided_slice %31 {offsets = [0, 24], sizes = [16, 8], strides = [1, 1]} : vector<16x32xf32> to vector<16x8xf32>
    %117 = arith.truncf %116 : vector<16x8xf32> to vector<16x8xbf16>
    %cst_32 = arith.constant dense<0.000000e+00> : vector<16x16xf32>
    %118 = tpu.matmul %113, %115, %cst_32 {dimension_numbers = #tpu.dot_dimension_numbers<[1], [1], [0], [0], [0, 0, 1, 0], [], []>} : vector<16x8xbf16>, vector<16x8xbf16>, vector<16x16xf32> -> vector<16x16xf32>
    %cst_33 = arith.constant 0.353553385 : f32
    %119 = vector.broadcast %cst_33 : f32 to vector<16x16xf32>
    %120 = arith.mulf %118, %119 : vector<16x16xf32>
    %121 = arith.addf %120, %19 : vector<16x16xf32>
    %cst_34 = arith.constant dense<0xFF800000> : vector<16xf32>
    %122 = vector.multi_reduction <maximumf>, %121, %cst_34 [1] : vector<16x16xf32> to vector<16xf32>
    %123 = vector.shape_cast %122 : vector<16xf32> to vector<16x1xf32>
    %124 = vector.broadcast %123 : vector<16x1xf32> to vector<16x16xf32>
    %125 = arith.subf %121, %124 : vector<16x16xf32>
    %126 = math.exp %125 : vector<16x16xf32>
    %cst_35 = arith.constant dense<0.000000e+00> : vector<16xf32>
    %127 = vector.multi_reduction <add>, %126, %cst_35 [1] : vector<16x16xf32> to vector<16xf32>
    %128 = vector.shape_cast %127 : vector<16xf32> to vector<16x1xf32>
    %129 = tpu.reciprocal %128 {approx = true} : vector<16x1xf32> -> vector<16x1xf32>
    %130 = vector.broadcast %129 : vector<16x1xf32> to vector<16x16xf32>
    %131 = arith.mulf %126, %130 : vector<16x16xf32>
    %132 = arith.truncf %131 : vector<16x16xf32> to vector<16x16xbf16>
    %cst_36 = arith.constant dense<0.000000e+00> : vector<16x8xf32>
    %133 = tpu.matmul %132, %117, %cst_36 {dimension_numbers = #tpu.dot_dimension_numbers<[1], [0], [0], [1], [0, 0, 1, 1], [], []>} : vector<16x16xbf16>, vector<16x8xbf16>, vector<16x8xf32> -> vector<16x8xf32>
    %134 = arith.truncf %133 : vector<16x8xf32> to vector<16x8xbf16>
    %135 = vector.extract_strided_slice %34 {offsets = [24, 0], sizes = [8, 32], strides = [1, 1]} : vector<32x32xbf16> to vector<8x32xbf16>
    %cst_37 = arith.constant dense<0.000000e+00> : vector<16x32xf32>
    %136 = tpu.matmul %134, %135, %cst_37 {dimension_numbers = #tpu.dot_dimension_numbers<[1], [0], [0], [1], [0, 0, 1, 1], [], []>} : vector<16x8xbf16>, vector<8x32xbf16>, vector<16x32xf32> -> vector<16x32xf32>
    %137 = arith.addf %111, %136 : vector<16x32xf32>
    %138 = arith.index_cast %arg0 : i32 to index
    %c0_38 = arith.constant 0 : index
    %c0_39 = arith.constant 0 : index
    %139 = vector.load %arg6[%138, %c0_38, %c0_39] : memref<2x1x32xf32, #tpu.memory_space<vmem>>, vector<1x1x32xf32>
    %140 = vector.shape_cast %139 : vector<1x1x32xf32> to vector<1x32xf32>
    %141 = vector.broadcast %140 : vector<1x32xf32> to vector<16x32xf32>
    %142 = arith.addf %137, %141 : vector<16x32xf32>
    %143 = arith.index_cast %arg0 : i32 to index
    %c0_40 = arith.constant 0 : index
    %c0_41 = arith.constant 0 : index
    %144 = vector.load %arg11[%143, %c0_40, %c0_41] : memref<2x4x32xf32, #tpu.memory_space<vmem>>, vector<1x4x32xf32>
    %145 = vector.shape_cast %144 : vector<1x4x32xf32> to vector<4x32xf32>
    %146 = arith.addf %3, %142 : vector<16x32xf32>
    %147 = vector.extract_strided_slice %145 {offsets = [0, 0], sizes = [1, 32], strides = [1, 1]} : vector<4x32xf32> to vector<1x32xf32>
    %148 = vector.extract_strided_slice %145 {offsets = [1, 0], sizes = [1, 32], strides = [1, 1]} : vector<4x32xf32> to vector<1x32xf32>
    %cst_42 = arith.constant dense<0.000000e+00> : vector<16xf32>
    %149 = vector.multi_reduction <add>, %146, %cst_42 [1] : vector<16x32xf32> to vector<16xf32>
    %150 = vector.shape_cast %149 : vector<16xf32> to vector<16x1xf32>
    %cst_43 = arith.constant 3.200000e+01 : f32
    %151 = vector.broadcast %cst_43 : f32 to vector<16x1xf32>
    %152 = arith.divf %150, %151 : vector<16x1xf32>
    %153 = vector.broadcast %152 : vector<16x1xf32> to vector<16x32xf32>
    %154 = arith.subf %146, %153 : vector<16x32xf32>
    %155 = arith.mulf %154, %154 : vector<16x32xf32>
    %cst_44 = arith.constant dense<0.000000e+00> : vector<16xf32>
    %156 = vector.multi_reduction <add>, %155, %cst_44 [1] : vector<16x32xf32> to vector<16xf32>
    %157 = vector.shape_cast %156 : vector<16xf32> to vector<16x1xf32>
    %cst_45 = arith.constant 3.200000e+01 : f32
    %158 = vector.broadcast %cst_45 : f32 to vector<16x1xf32>
    %159 = arith.divf %157, %158 : vector<16x1xf32>
    %160 = vector.broadcast %152 : vector<16x1xf32> to vector<16x32xf32>
    %161 = arith.subf %146, %160 : vector<16x32xf32>
    %cst_46 = arith.constant 9.99999974E-6 : f32
    %162 = vector.broadcast %cst_46 : f32 to vector<16x1xf32>
    %163 = arith.addf %159, %162 : vector<16x1xf32>
    %164 = math.rsqrt %163 : vector<16x1xf32>
    %165 = vector.broadcast %164 : vector<16x1xf32> to vector<16x32xf32>
    %166 = arith.mulf %161, %165 : vector<16x32xf32>
    %167 = vector.broadcast %147 : vector<1x32xf32> to vector<16x32xf32>
    %168 = arith.mulf %166, %167 : vector<16x32xf32>
    %169 = vector.broadcast %148 : vector<1x32xf32> to vector<16x32xf32>
    %170 = arith.addf %168, %169 : vector<16x32xf32>
    %171 = arith.truncf %170 : vector<16x32xf32> to vector<16x32xbf16>
    %172 = arith.index_cast %arg0 : i32 to index
    %c0_47 = arith.constant 0 : index
    %c0_48 = arith.constant 0 : index
    %173 = vector.load %arg7[%172, %c0_47, %c0_48] : memref<2x32x64xbf16, #tpu.memory_space<vmem>>, vector<1x32x64xbf16>
    %174 = vector.shape_cast %173 : vector<1x32x64xbf16> to vector<32x64xbf16>
    %cst_49 = arith.constant dense<0.000000e+00> : vector<16x64xf32>
    %175 = tpu.matmul %171, %174, %cst_49 {dimension_numbers = #tpu.dot_dimension_numbers<[1], [0], [0], [1], [0, 0, 1, 1], [], []>} : vector<16x32xbf16>, vector<32x64xbf16>, vector<16x64xf32> -> vector<16x64xf32>
    %176 = arith.index_cast %arg0 : i32 to index
    %c0_50 = arith.constant 0 : index
    %c0_51 = arith.constant 0 : index
    %177 = vector.load %arg8[%176, %c0_50, %c0_51] : memref<2x1x64xf32, #tpu.memory_space<vmem>>, vector<1x1x64xf32>
    %178 = vector.shape_cast %177 : vector<1x1x64xf32> to vector<1x64xf32>
    %179 = vector.broadcast %178 : vector<1x64xf32> to vector<16x64xf32>
    %180 = arith.addf %175, %179 : vector<16x64xf32>
    %181 = arith.mulf %180, %180 : vector<16x64xf32>
    %182 = arith.mulf %180, %181 : vector<16x64xf32>
    %cst_52 = arith.constant 4.471500e-02 : f32
    %183 = vector.broadcast %cst_52 : f32 to vector<16x64xf32>
    %184 = arith.mulf %183, %182 : vector<16x64xf32>
    %185 = arith.addf %180, %184 : vector<16x64xf32>
    %cst_53 = arith.constant 0.797884583 : f32
    %186 = vector.broadcast %cst_53 : f32 to vector<16x64xf32>
    %187 = arith.mulf %186, %185 : vector<16x64xf32>
    %188 = math.tanh %187 : vector<16x64xf32>
    %cst_54 = arith.constant 1.000000e+00 : f32
    %189 = vector.broadcast %cst_54 : f32 to vector<16x64xf32>
    %190 = arith.addf %189, %188 : vector<16x64xf32>
    %cst_55 = arith.constant 5.000000e-01 : f32
    %191 = vector.broadcast %cst_55 : f32 to vector<16x64xf32>
    %192 = arith.mulf %191, %190 : vector<16x64xf32>
    %193 = arith.mulf %180, %192 : vector<16x64xf32>
    %194 = arith.truncf %193 : vector<16x64xf32> to vector<16x64xbf16>
    %195 = arith.index_cast %arg0 : i32 to index
    %c0_56 = arith.constant 0 : index
    %c0_57 = arith.constant 0 : index
    %196 = vector.load %arg9[%195, %c0_56, %c0_57] : memref<2x64x32xbf16, #tpu.memory_space<vmem>>, vector<1x64x32xbf16>
    %197 = vector.shape_cast %196 : vector<1x64x32xbf16> to vector<64x32xbf16>
    %cst_58 = arith.constant dense<0.000000e+00> : vector<16x32xf32>
    %198 = tpu.matmul %194, %197, %cst_58 {dimension_numbers = #tpu.dot_dimension_numbers<[1], [0], [0], [1], [0, 0, 1, 1], [], []>} : vector<16x64xbf16>, vector<64x32xbf16>, vector<16x32xf32> -> vector<16x32xf32>
    %199 = arith.index_cast %arg0 : i32 to index
    %c0_59 = arith.constant 0 : index
    %c0_60 = arith.constant 0 : index
    %200 = vector.load %arg10[%199, %c0_59, %c0_60] : memref<2x1x32xf32, #tpu.memory_space<vmem>>, vector<1x1x32xf32>
    %201 = vector.shape_cast %200 : vector<1x1x32xf32> to vector<1x32xf32>
    %202 = vector.broadcast %201 : vector<1x32xf32> to vector<16x32xf32>
    %203 = arith.addf %198, %202 : vector<16x32xf32>
    %204 = arith.addf %170, %203 : vector<16x32xf32>
    %205 = vector.extract_strided_slice %145 {offsets = [2, 0], sizes = [1, 32], strides = [1, 1]} : vector<4x32xf32> to vector<1x32xf32>
    %206 = vector.extract_strided_slice %145 {offsets = [3, 0], sizes = [1, 32], strides = [1, 1]} : vector<4x32xf32> to vector<1x32xf32>
    %cst_61 = arith.constant dense<0.000000e+00> : vector<16xf32>
    %207 = vector.multi_reduction <add>, %204, %cst_61 [1] : vector<16x32xf32> to vector<16xf32>
    %208 = vector.shape_cast %207 : vector<16xf32> to vector<16x1xf32>
    %cst_62 = arith.constant 3.200000e+01 : f32
    %209 = vector.broadcast %cst_62 : f32 to vector<16x1xf32>
    %210 = arith.divf %208, %209 : vector<16x1xf32>
    %211 = vector.broadcast %210 : vector<16x1xf32> to vector<16x32xf32>
    %212 = arith.subf %204, %211 : vector<16x32xf32>
    %213 = arith.mulf %212, %212 : vector<16x32xf32>
    %cst_63 = arith.constant dense<0.000000e+00> : vector<16xf32>
    %214 = vector.multi_reduction <add>, %213, %cst_63 [1] : vector<16x32xf32> to vector<16xf32>
    %215 = vector.shape_cast %214 : vector<16xf32> to vector<16x1xf32>
    %cst_64 = arith.constant 3.200000e+01 : f32
    %216 = vector.broadcast %cst_64 : f32 to vector<16x1xf32>
    %217 = arith.divf %215, %216 : vector<16x1xf32>
    %218 = vector.broadcast %210 : vector<16x1xf32> to vector<16x32xf32>
    %219 = arith.subf %204, %218 : vector<16x32xf32>
    %cst_65 = arith.constant 9.99999974E-6 : f32
    %220 = vector.broadcast %cst_65 : f32 to vector<16x1xf32>
    %221 = arith.addf %217, %220 : vector<16x1xf32>
    %222 = math.rsqrt %221 : vector<16x1xf32>
    %223 = vector.broadcast %222 : vector<16x1xf32> to vector<16x32xf32>
    %224 = arith.mulf %219, %223 : vector<16x32xf32>
    %225 = vector.broadcast %205 : vector<1x32xf32> to vector<16x32xf32>
    %226 = arith.mulf %224, %225 : vector<16x32xf32>
    %227 = vector.broadcast %206 : vector<1x32xf32> to vector<16x32xf32>
    %228 = arith.addf %226, %227 : vector<16x32xf32>
    %c0_66 = arith.constant 0 : index
    %c0_67 = arith.constant 0 : index
    %229 = vector.load %arg15[%c0_66, %c0_67] : memref<16x32xf32, #tpu.memory_space<vmem>>, vector<16x32xf32>
    tpu.vector_store %arg15[%c0_66, %c0_67], %228 {strides = array<i32>} : memref<16x32xf32, #tpu.memory_space<vmem>>, vector<16x32xf32>,
    %c1_i32 = arith.constant 1 : i32
    %230 = arith.cmpi eq, %arg0, %c1_i32 : i32
    %231 = arith.extui %230 : i1 to i32
    %c0_i32_68 = arith.constant 0 : i32
    %232 = arith.cmpi ne, %231, %c0_i32_68 : i32
    scf.if %232 {
      %233 = tpu.iota {dimensions = array<i32: 0>} : vector<2x16xi32>
      %234 = tpu.iota {dimensions = array<i32: 1>} : vector<2x16xi32>
      %c8_i32 = arith.constant 8 : i32
      %235 = vector.broadcast %c8_i32 : i32 to vector<2x16xi32>
      %236 = arith.muli %233, %235 : vector<2x16xi32>
      %237 = arith.cmpi eq, %234, %236 : vector<2x16xi32>
      %238 = arith.extui %237 : vector<2x16xi1> to vector<2x16xi32>
      %239 = arith.sitofp %238 : vector<2x16xi32> to vector<2x16xf32>
      %240 = arith.truncf %239 : vector<2x16xf32> to vector<2x16xbf16>
      %241 = arith.truncf %228 : vector<16x32xf32> to vector<16x32xbf16>
      %cst_69 = arith.constant dense<0.000000e+00> : vector<2x32xf32>
      %242 = tpu.matmul %240, %241, %cst_69 {dimension_numbers = #tpu.dot_dimension_numbers<[1], [0], [0], [1], [0, 0, 1, 1], [], []>} : vector<2x16xbf16>, vector<16x32xbf16>, vector<2x32xf32> -> vector<2x32xf32>
      %243 = arith.truncf %242 : vector<2x32xf32> to vector<2x32xbf16>
      %c0_70 = arith.constant 0 : index
      %c0_71 = arith.constant 0 : index
      %244 = vector.load %arg12[%c0_70, %c0_71] : memref<32x128xbf16, #tpu.memory_space<vmem>>, vector<32x128xbf16>
      %cst_72 = arith.constant dense<0.000000e+00> : vector<2x128xf32>
      %245 = tpu.matmul %243, %244, %cst_72 {dimension_numbers = #tpu.dot_dimension_numbers<[1], [0], [0], [1], [0, 0, 1, 1], [], []>} : vector<2x32xbf16>, vector<32x128xbf16>, vector<2x128xf32> -> vector<2x128xf32>
      %c0_73 = arith.constant 0 : index
      %c0_74 = arith.constant 0 : index
      %246 = vector.load %arg13[%c0_73, %c0_74] : memref<1x128xf32, #tpu.memory_space<vmem>>, vector<1x128xf32>
      %247 = vector.broadcast %246 : vector<1x128xf32> to vector<2x128xf32>
      %248 = arith.addf %245, %247 : vector<2x128xf32>
      %cst_75 = arith.constant 5.000000e-01 : f32
      %249 = vector.broadcast %cst_75 : f32 to vector<2x128xf32>
      %250 = arith.mulf %248, %249 : vector<2x128xf32>
      %c0_76 = arith.constant 0 : index
      %c0_77 = arith.constant 0 : index
      %251 = vector.load %arg14[%c0_76, %c0_77] : memref<2x128xf32, #tpu.memory_space<vmem>>, vector<2x128xf32>
      tpu.vector_store %arg14[%c0_76, %c0_77], %250 {strides = array<i32>} : memref<2x128xf32, #tpu.memory_space<vmem>>, vector<2x128xf32>,
    } else {
    }
    return
  }
  func.func @transform_0(%arg0: i32) -> (i32, i32) {
    %c0_i32 = arith.constant 0 : i32
    %c0_i32_0 = arith.constant 0 : i32
    %c0_i32_1 = arith.constant 0 : i32
    return %c0_i32, %c0_i32_0 : i32, i32
  }
  func.func @transform_1(%arg0: i32) -> (i32, i32) {
    %c0_i32 = arith.constant 0 : i32
    %c0_i32_0 = arith.constant 0 : i32
    %c0_i32_1 = arith.constant 0 : i32
    return %c0_i32, %c0_i32_0 : i32, i32
  }
  func.func @transform_2(%arg0: i32) -> (i32, i32, i32) {
    %c0_i32 = arith.constant 0 : i32
    %c0_i32_0 = arith.constant 0 : i32
    %c0_i32_1 = arith.constant 0 : i32
    %c0_i32_2 = arith.constant 0 : i32
    return %c0_i32, %c0_i32_0, %c0_i32_1 : i32, i32, i32
  }
  func.func @transform_3(%arg0: i32) -> (i32, i32, i32) {
    %c0_i32 = arith.constant 0 : i32
    %c0_i32_0 = arith.constant 0 : i32
    %c0_i32_1 = arith.constant 0 : i32
    %c0_i32_2 = arith.constant 0 : i32
    return %c0_i32, %c0_i32_0, %c0_i32_1 : i32, i32, i32
  }
  func.func @transform_4(%arg0: i32) -> (i32, i32, i32) {
    %c0_i32 = arith.constant 0 : i32
    %c0_i32_0 = arith.constant 0 : i32
    %c0_i32_1 = arith.constant 0 : i32
    %c0_i32_2 = arith.constant 0 : i32
    return %c0_i32, %c0_i32_0, %c0_i32_1 : i32, i32, i32
  }
  func.func @transform_5(%arg0: i32) -> (i32, i32, i32) {
    %c0_i32 = arith.constant 0 : i32
    %c0_i32_0 = arith.constant 0 : i32
    %c0_i32_1 = arith.constant 0 : i32
    %c0_i32_2 = arith.constant 0 : i32
    return %c0_i32, %c0_i32_0, %c0_i32_1 : i32, i32, i32
  }
  func.func @transform_6(%arg0: i32) -> (i32, i32, i32) {
    %c0_i32 = arith.constant 0 : i32
    %c0_i32_0 = arith.constant 0 : i32
    %c0_i32_1 = arith.constant 0 : i32
    %c0_i32_2 = arith.constant 0 : i32
    return %c0_i32, %c0_i32_0, %c0_i32_1 : i32, i32, i32
  }
  func.func @transform_7(%arg0: i32) -> (i32, i32, i32) {
    %c0_i32 = arith.constant 0 : i32
    %c0_i32_0 = arith.constant 0 : i32
    %c0_i32_1 = arith.constant 0 : i32
    %c0_i32_2 = arith.constant 0 : i32
    return %c0_i32, %c0_i32_0, %c0_i32_1 : i32, i32, i32
  }
  func.func @transform_8(%arg0: i32) -> (i32, i32, i32) {
    %c0_i32 = arith.constant 0 : i32
    %c0_i32_0 = arith.constant 0 : i32
    %c0_i32_1 = arith.constant 0 : i32
    %c0_i32_2 = arith.constant 0 : i32
    return %c0_i32, %c0_i32_0, %c0_i32_1 : i32, i32, i32
  }
  func.func @transform_9(%arg0: i32) -> (i32, i32, i32) {
    %c0_i32 = arith.constant 0 : i32
    %c0_i32_0 = arith.constant 0 : i32
    %c0_i32_1 = arith.constant 0 : i32
    %c0_i32_2 = arith.constant 0 : i32
    return %c0_i32, %c0_i32_0, %c0_i32_1 : i32, i32, i32
  }
  func.func @transform_10(%arg0: i32) -> (i32, i32, i32) {
    %c0_i32 = arith.constant 0 : i32
    %c0_i32_0 = arith.constant 0 : i32
    %c0_i32_1 = arith.constant 0 : i32
    %c0_i32_2 = arith.constant 0 : i32
    return %c0_i32, %c0_i32_0, %c0_i32_1 : i32, i32, i32
  }
  func.func @transform_11(%arg0: i32) -> (i32, i32) {
    %c0_i32 = arith.constant 0 : i32
    %c0_i32_0 = arith.constant 0 : i32
    %c0_i32_1 = arith.constant 0 : i32
    return %c0_i32, %c0_i32_0 : i32, i32
  }
  func.func @transform_12(%arg0: i32) -> (i32, i32) {
    %c0_i32 = arith.constant 0 : i32
    %c0_i32_0 = arith.constant 0 : i32
    %c0_i32_1 = arith.constant 0 : i32
    return %c0_i32, %c0_i32_0 : i32, i32
  }
  func.func @transform_13(%arg0: i32) -> (i32, i32) {
    %c0_i32 = arith.constant 0 : i32
    %c0_i32_0 = arith.constant 0 : i32
    %c0_i32_1 = arith.constant 0 : i32
    return %c0_i32, %c0_i32_0 : i32, i32
  }
}

</mosaic_0001>

<llo_original>
// kernel: router_classifier_forward.1
$region0: #{router_classifier_forward.1}
  #allocation0 [shape = 'u32[]', space=smem, size = 0x4, offset = 0x4, fixed_abs, tag = 'smem constant byte address 0x4 - core index']
  #allocation1 [shape = 'u32[144,128]{1,0:T(1,128)}', space=vmem, size = 0x12000, scoped, tag = 'internal scratch']
  #allocation2 [shape = 'f32[16,32]{1,0:T(8,128)}', space=vmem, size = 0x2000, scoped, tag = 'scratch operand']
  %s0 = inlined_call_operand.vmem [shape: f32[16,32], index: 0, kind: input, shape index: {}]
  %s1 = inlined_call_operand.vmem [shape: f32[1,16], index: 1, kind: input, shape index: {}]
  %s2 = inlined_call_operand.vmem [shape: bf16[2,32,96], index: 2, kind: input, shape index: {}]
  %s3 = inlined_call_operand.vmem [shape: f32[2,1,96], index: 3, kind: input, shape index: {}]
  %s4 = inlined_call_operand.vmem [shape: bf16[2,32,32], index: 4, kind: input, shape index: {}]
  %s5 = inlined_call_operand.vmem [shape: f32[2,1,32], index: 5, kind: input, shape index: {}]
  %s6 = inlined_call_operand.vmem [shape: bf16[2,32,64], index: 6, kind: input, shape index: {}]
  %s7 = inlined_call_operand.vmem [shape: f32[2,1,64], index: 7, kind: input, shape index: {}]
  %s8 = inlined_call_operand.vmem [shape: bf16[2,64,32], index: 8, kind: input, shape index: {}]
  %s9 = inlined_call_operand.vmem [shape: f32[2,1,32], index: 9, kind: input, shape index: {}]
  %s10 = inlined_call_operand.vmem [shape: f32[2,4,32], index: 10, kind: input, shape index: {}]
  %s11 = inlined_call_operand.vmem [shape: bf16[32,128], index: 11, kind: input, shape index: {}]
  %s12 = inlined_call_operand.vmem [shape: f32[1,128], index: 12, kind: input, shape index: {}]
  %s13 = inlined_call_operand.hbm [shape: f32[2,128], index: 13, kind: output, shape index: {}]
  %s14 = sld [smem:[#allocation0]]
  $region93: #{router_classifier_forward.1} parent=0
    _
  %s16 = ssub.s32 1, %s14
  %s17 = scalar_select 0, %s16, %s14
  $region1: #{router_classifier_forward.1} parent=0
    #allocation3 [shape = 'u8[1024]{0}', space=vmem, size = 0x400, scoped, tag = 'output window, operand 0, single buffered']
    #allocation4 [shape = 's32[2]{0}', space=sflag, size = 0x8, scoped, tag = 'scoped memory for router_classifier_forward.1']
    %18 = vsyncpa [#allocation4], 0
    loop: start=0, step=1, limit=4
    $region2: #{router_classifier_forward.1} parent=1 // loop_pre_header
      _
    $region3: #{router_classifier_forward.1} parent=1 // loop_header
      %s20 = sphi 0, %s24
      %p21 = scmp.ge.s32.totalorder %s20, 4
      %s28 = sphi 0, %s28
      %s30 = sphi 0, %s28
      %s31 = sphi 0, %s30
      %s45 = sphi 0, %s31
      %s49 = sphi 0, %s49
      %s51 = sphi 0, %s49
      %s52 = sphi 0, %s51
      %s66 = sphi 0, %s52
      %s70 = sphi 0, %s70
      %s72 = sphi 0, %s70
      %s73 = sphi 0, %s72
      %s87 = sphi 0, %s73
      %s91 = sphi 0, %s91
      %s93 = sphi 0, %s91
      %s94 = sphi 0, %s93
      %s108 = sphi 0, %s94
      %s112 = sphi 0, %s112
      %s114 = sphi 0, %s112
      %s115 = sphi 0, %s114
      %s129 = sphi 0, %s115
      %s133 = sphi 0, %s133
      %s135 = sphi 0, %s133
      %s136 = sphi 0, %s135
      %s150 = sphi 0, %s136
      %s154 = sphi 0, %s154
      %s156 = sphi 0, %s154
      %s157 = sphi 0, %s156
      %s171 = sphi 0, %s157
      %s175 = sphi 0, %s175
      %s177 = sphi 0, %s175
      %s178 = sphi 0, %s177
      %s192 = sphi 0, %s178
      %s196 = sphi 0, %s196
      %s198 = sphi 0, %s196
      %s199 = sphi 0, %s198
      %s213 = sphi 0, %s199
      %s217 = sphi 0, %s217
      %s219 = sphi 0, %s217
      %s220 = sphi 0, %s219
      %s234 = sphi 0, %s220
      %s238 = sphi 0, %s238
      %s240 = sphi 0, %s238
      %s241 = sphi 0, %s240
      %s255 = sphi 0, %s241
      %s259 = sphi 0, %s259
      %s261 = sphi 0, %s259
      %s262 = sphi 0, %s261
      %s276 = sphi 0, %s262
      %s280 = sphi 0, %s280
      %s282 = sphi 0, %s280
      %s283 = sphi 0, %s282
      %s297 = sphi 0, %s283
      %s301 = sphi 0, %s301
      %s303 = sphi 0, %s301
      %s304 = sphi 0, %s303
      %s318 = sphi 0, %s304
    $region4: #{router_classifier_forward.1} parent=1 // loop_header_branch
      %23 = sbr.rel (%p21) target = $region8
    $region5: #{router_classifier_forward.1} parent=1 // loop_body
      %s25 = ssub.s32 %s20, 1
      %s26 = ssub.s32 %s20, 2
      %s27 = sadd.s32 %s20, 1
      %s29 = sadd.s32 %s28, 1
      %p32 = scmp.eq.s32.totalorder %s20, 1
      %p33 = scmp.ne.s32.totalorder %s28, %s30
      %p34 = scmp.eq.s32.totalorder %s20, 0
      %p35 = por %p33, %p34
      %p36 = scmp.ne.s32.totalorder %s28, %s30
      %p37 = scmp.eq.s32.totalorder %s25, 1
      %p38 = por %p36, %p37
      %p39 = scmp.ne.s32.totalorder %s30, %s31
      %p40 = scmp.eq.s32.totalorder %s25, 0
      %p41 = por %p39, %p40
      %p42 = scmp.ne.s32.totalorder %s30, %s31
      %p43 = scmp.eq.s32.totalorder %s26, 1
      %p44 = por %p42, %p43
      %p46 = scmp.ne.s32.totalorder %s31, %s45
      %p47 = scmp.eq.s32.totalorder %s26, 0
      %p48 = por %p46, %p47
      %s50 = sadd.s32 %s49, 1
      %p53 = scmp.eq.s32.totalorder %s20, 1
      %p54 = scmp.ne.s32.totalorder %s49, %s51
      %p55 = scmp.eq.s32.totalorder %s20, 0
      %p56 = por %p54, %p55
      %p57 = scmp.ne.s32.totalorder %s49, %s51
      %p58 = scmp.eq.s32.totalorder %s25, 1
      %p59 = por %p57, %p58
      %p60 = scmp.ne.s32.totalorder %s51, %s52
      %p61 = scmp.eq.s32.totalorder %s25, 0
      %p62 = por %p60, %p61
      %p63 = scmp.ne.s32.totalorder %s51, %s52
      %p64 = scmp.eq.s32.totalorder %s26, 1
      %p65 = por %p63, %p64
      %p67 = scmp.ne.s32.totalorder %s52, %s66
      %p68 = scmp.eq.s32.totalorder %s26, 0
      %p69 = por %p67, %p68
      %s71 = sadd.s32 %s70, 1
      %p74 = scmp.eq.s32.totalorder %s20, 1
      %p75 = scmp.ne.s32.totalorder %s70, %s72
      %p76 = scmp.eq.s32.totalorder %s20, 0
      %p77 = por %p75, %p76
      %p78 = scmp.ne.s32.totalorder %s70, %s72
      %p79 = scmp.eq.s32.totalorder %s25, 1
      %p80 = por %p78, %p79
      %p81 = scmp.ne.s32.totalorder %s72, %s73
      %p82 = scmp.eq.s32.totalorder %s25, 0
      %p83 = por %p81, %p82
      %p84 = scmp.ne.s32.totalorder %s72, %s73
      %p85 = scmp.eq.s32.totalorder %s26, 1
      %p86 = por %p84, %p85
      %p88 = scmp.ne.s32.totalorder %s73, %s87
      %p89 = scmp.eq.s32.totalorder %s26, 0
      %p90 = por %p88, %p89
      %s92 = sadd.s32 %s91, 1
      %p95 = scmp.eq.s32.totalorder %s20, 1
      %p96 = scmp.ne.s32.totalorder %s91, %s93
      %p97 = scmp.eq.s32.totalorder %s20, 0
      %p98 = por %p96, %p97
      %p99 = scmp.ne.s32.totalorder %s91, %s93
      %p100 = scmp.eq.s32.totalorder %s25, 1
      %p101 = por %p99, %p100
      %p102 = scmp.ne.s32.totalorder %s93, %s94
      %p103 = scmp.eq.s32.totalorder %s25, 0
      %p104 = por %p102, %p103
      %p105 = scmp.ne.s32.totalorder %s93, %s94
      %p106 = scmp.eq.s32.totalorder %s26, 1
      %p107 = por %p105, %p106
      %p109 = scmp.ne.s32.totalorder %s94, %s108
      %p110 = scmp.eq.s32.totalorder %s26, 0
      %p111 = por %p109, %p110
      %s113 = sadd.s32 %s112, 1
      %p116 = scmp.eq.s32.totalorder %s20, 1
      %p117 = scmp.ne.s32.totalorder %s112, %s114
      %p118 = scmp.eq.s32.totalorder %s20, 0
      %p119 = por %p117, %p118
      %p120 = scmp.ne.s32.totalorder %s112, %s114
      %p121 = scmp.eq.s32.totalorder %s25, 1
      %p122 = por %p120, %p121
      %p123 = scmp.ne.s32.totalorder %s114, %s115
      %p124 = scmp.eq.s32.totalorder %s25, 0
      %p125 = por %p123, %p124
      %p126 = scmp.ne.s32.totalorder %s114, %s115
      %p127 = scmp.eq.s32.totalorder %s26, 1
      %p128 = por %p126, %p127
      %p130 = scmp.ne.s32.totalorder %s115, %s129
      %p131 = scmp.eq.s32.totalorder %s26, 0
      %p132 = por %p130, %p131
      %s134 = sadd.s32 %s133, 1
      %p137 = scmp.eq.s32.totalorder %s20, 1
      %p138 = scmp.ne.s32.totalorder %s133, %s135
      %p139 = scmp.eq.s32.totalorder %s20, 0
      %p140 = por %p138, %p139
      %p141 = scmp.ne.s32.totalorder %s133, %s135
      %p142 = scmp.eq.s32.totalorder %s25, 1
      %p143 = por %p141, %p142
      %p144 = scmp.ne.s32.totalorder %s135, %s136
      %p145 = scmp.eq.s32.totalorder %s25, 0
      %p146 = por %p144, %p145
      %p147 = scmp.ne.s32.totalorder %s135, %s136
      %p148 = scmp.eq.s32.totalorder %s26, 1
      %p149 = por %p147, %p148
      %p151 = scmp.ne.s32.totalorder %s136, %s150
      %p152 = scmp.eq.s32.totalorder %s26, 0
      %p153 = por %p151, %p152
      %s155 = sadd.s32 %s154, 1
      %p158 = scmp.eq.s32.totalorder %s20, 1
      %p159 = scmp.ne.s32.totalorder %s154, %s156
      %p160 = scmp.eq.s32.totalorder %s20, 0
      %p161 = por %p159, %p160
      %p162 = scmp.ne.s32.totalorder %s154, %s156
      %p163 = scmp.eq.s32.totalorder %s25, 1
      %p164 = por %p162, %p163
      %p165 = scmp.ne.s32.totalorder %s156, %s157
      %p166 = scmp.eq.s32.totalorder %s25, 0
      %p167 = por %p165, %p166
      %p168 = scmp.ne.s32.totalorder %s156, %s157
      %p169 = scmp.eq.s32.totalorder %s26, 1
      %p170 = por %p168, %p169
      %p172 = scmp.ne.s32.totalorder %s157, %s171
      %p173 = scmp.eq.s32.totalorder %s26, 0
      %p174 = por %p172, %p173
      %s176 = sadd.s32 %s175, 1
      %p179 = scmp.eq.s32.totalorder %s20, 1
      %p180 = scmp.ne.s32.totalorder %s175, %s177
      %p181 = scmp.eq.s32.totalorder %s20, 0
      %p182 = por %p180, %p181
      %p183 = scmp.ne.s32.totalorder %s175, %s177
      %p184 = scmp.eq.s32.totalorder %s25, 1
      %p185 = por %p183, %p184
      %p186 = scmp.ne.s32.totalorder %s177, %s178
      %p187 = scmp.eq.s32.totalorder %s25, 0
      %p188 = por %p186, %p187
      %p189 = scmp.ne.s32.totalorder %s177, %s178
      %p190 = scmp.eq.s32.totalorder %s26, 1
      %p191 = por %p189, %p190
      %p193 = scmp.ne.s32.totalorder %s178, %s192
      %p194 = scmp.eq.s32.totalorder %s26, 0
      %p195 = por %p193, %p194
      %s197 = sadd.s32 %s196, 1
      %p200 = scmp.eq.s32.totalorder %s20, 1
      %p201 = scmp.ne.s32.totalorder %s196, %s198
      %p202 = scmp.eq.s32.totalorder %s20, 0
      %p203 = por %p201, %p202
      %p204 = scmp.ne.s32.totalorder %s196, %s198
      %p205 = scmp.eq.s32.totalorder %s25, 1
      %p206 = por %p204, %p205
      %p207 = scmp.ne.s32.totalorder %s198, %s199
      %p208 = scmp.eq.s32.totalorder %s25, 0
      %p209 = por %p207, %p208
      %p210 = scmp.ne.s32.totalorder %s198, %s199
      %p211 = scmp.eq.s32.totalorder %s26, 1
      %p212 = por %p210, %p211
      %p214 = scmp.ne.s32.totalorder %s199, %s213
      %p215 = scmp.eq.s32.totalorder %s26, 0
      %p216 = por %p214, %p215
      %s218 = sadd.s32 %s217, 1
      %p221 = scmp.eq.s32.totalorder %s20, 1
      %p222 = scmp.ne.s32.totalorder %s217, %s219
      %p223 = scmp.eq.s32.totalorder %s20, 0
      %p224 = por %p222, %p223
      %p225 = scmp.ne.s32.totalorder %s217, %s219
      %p226 = scmp.eq.s32.totalorder %s25, 1
      %p227 = por %p225, %p226
      %p228 = scmp.ne.s32.totalorder %s219, %s220
      %p229 = scmp.eq.s32.totalorder %s25, 0
      %p230 = por %p228, %p229
      %p231 = scmp.ne.s32.totalorder %s219, %s220
      %p232 = scmp.eq.s32.totalorder %s26, 1
      %p233 = por %p231, %p232
      %p235 = scmp.ne.s32.totalorder %s220, %s234
      %p236 = scmp.eq.s32.totalorder %s26, 0
      %p237 = por %p235, %p236
      %s239 = sadd.s32 %s238, 1
      %p242 = scmp.eq.s32.totalorder %s20, 1
      %p243 = scmp.ne.s32.totalorder %s238, %s240
      %p244 = scmp.eq.s32.totalorder %s20, 0
      %p245 = por %p243, %p244
      %p246 = scmp.ne.s32.totalorder %s238, %s240
      %p247 = scmp.eq.s32.totalorder %s25, 1
      %p248 = por %p246, %p247
      %p249 = scmp.ne.s32.totalorder %s240, %s241
      %p250 = scmp.eq.s32.totalorder %s25, 0
      %p251 = por %p249, %p250
      %p252 = scmp.ne.s32.totalorder %s240, %s241
      %p253 = scmp.eq.s32.totalorder %s26, 1
      %p254 = por %p252, %p253
      %p256 = scmp.ne.s32.totalorder %s241, %s255
      %p257 = scmp.eq.s32.totalorder %s26, 0
      %p258 = por %p256, %p257
      %s260 = sadd.s32 %s259, 1
      %p263 = scmp.eq.s32.totalorder %s20, 1
      %p264 = scmp.ne.s32.totalorder %s259, %s261
      %p265 = scmp.eq.s32.totalorder %s20, 0
      %p266 = por %p264, %p265
      %p267 = scmp.ne.s32.totalorder %s259, %s261
      %p268 = scmp.eq.s32.totalorder %s25, 1
      %p269 = por %p267, %p268
      %p270 = scmp.ne.s32.totalorder %s261, %s262
      %p271 = scmp.eq.s32.totalorder %s25, 0
      %p272 = por %p270, %p271
      %p273 = scmp.ne.s32.totalorder %s261, %s262
      %p274 = scmp.eq.s32.totalorder %s26, 1
      %p275 = por %p273, %p274
      %p277 = scmp.ne.s32.totalorder %s262, %s276
      %p278 = scmp.eq.s32.totalorder %s26, 0
      %p279 = por %p277, %p278
      %s281 = sadd.s32 %s280, 1
      %p284 = scmp.eq.s32.totalorder %s20, 1
      %p285 = scmp.ne.s32.totalorder %s280, %s282
      %p286 = scmp.eq.s32.totalorder %s20, 0
      %p287 = por %p285, %p286
      %p288 = scmp.ne.s32.totalorder %s280, %s282
      %p289 = scmp.eq.s32.totalorder %s25, 1
      %p290 = por %p288, %p289
      %p291 = scmp.ne.s32.totalorder %s282, %s283
      %p292 = scmp.eq.s32.totalorder %s25, 0
      %p293 = por %p291, %p292
      %p294 = scmp.ne.s32.totalorder %s282, %s283
      %p295 = scmp.eq.s32.totalorder %s26, 1
      %p296 = por %p294, %p295
      %p298 = scmp.ne.s32.totalorder %s283, %s297
      %p299 = scmp.eq.s32.totalorder %s26, 0
      %p300 = por %p298, %p299
      %s302 = sadd.s32 %s301, 1
      %p305 = scmp.eq.s32.totalorder %s20, 1
      %p306 = scmp.ne.s32.totalorder %s301, %s303
      %p307 = scmp.eq.s32.totalorder %s20, 0
      %p308 = por %p306, %p307
      %p309 = scmp.ne.s32.totalorder %s301, %s303
      %p310 = scmp.eq.s32.totalorder %s25, 1
      %p311 = por %p309, %p310
      %p312 = scmp.ne.s32.totalorder %s303, %s304
      %p313 = scmp.eq.s32.totalorder %s25, 0
      %p314 = por %p312, %p313
      %p315 = scmp.ne.s32.totalorder %s303, %s304
      %p316 = scmp.eq.s32.totalorder %s26, 1
      %p317 = por %p315, %p316
      %p319 = scmp.ne.s32.totalorder %s304, %s318
      %p320 = scmp.eq.s32.totalorder %s26, 0
      %p321 = por %p319, %p320
      %p322 = scmp.le.s32.totalorder 1, %s20
      %p323 = scmp.lt.s32.totalorder %s20, 3
      %p324 = pnand %p322, %p323
      %p325 = pneg %p324
      // Predicated region
      $region9: #{router_classifier_forward.1} parent=5 // pred_check
        _
      $region10: #{router_classifier_forward.1} parent=5 // pred_check_branch
        %327 = sbr.rel (%p324) target = $region12
      $region11: #{router_classifier_forward.1} parent=5 // pred_region
        %s328 = ssub.s32 %s20, 1
        // Predicated region
        $region13: #{router_classifier_forward.1} parent=11 // pred_check
          %p329 = pneg %p41
        $region14: #{router_classifier_forward.1} parent=11 // pred_check_branch
          %331 = sbr.rel (%p329) target = $region16
        $region15: #{router_classifier_forward.1} parent=11 // pred_region
          _
        $region16: #{router_classifier_forward.1} parent=11 // pred_fallthru
          _
        // Predicated region
        $region17: #{router_classifier_forward.1} parent=11 // pred_check
          %p332 = pneg %p62
        $region18: #{router_classifier_forward.1} parent=11 // pred_check_branch
          %334 = sbr.rel (%p332) target = $region20
        $region19: #{router_classifier_forward.1} parent=11 // pred_region
          _
        $region20: #{router_classifier_forward.1} parent=11 // pred_fallthru
          _
        // Predicated region
        $region21: #{router_classifier_forward.1} parent=11 // pred_check
          %p335 = pneg %p83
        $region22: #{router_classifier_forward.1} parent=11 // pred_check_branch
          %337 = sbr.rel (%p335) target = $region24
        $region23: #{router_classifier_forward.1} parent=11 // pred_region
          _
        $region24: #{router_classifier_forward.1} parent=11 // pred_fallthru
          _
        // Predicated region
        $region25: #{router_classifier_forward.1} parent=11 // pred_check
          %p338 = pneg %p104
        $region26: #{router_classifier_forward.1} parent=11 // pred_check_branch
          %340 = sbr.rel (%p338) target = $region28
        $region27: #{router_classifier_forward.1} parent=11 // pred_region
          _
        $region28: #{router_classifier_forward.1} parent=11 // pred_fallthru
          _
        // Predicated region
        $region29: #{router_classifier_forward.1} parent=11 // pred_check
          %p341 = pneg %p125
        $region30: #{router_classifier_forward.1} parent=11 // pred_check_branch
          %343 = sbr.rel (%p341) target = $region32
        $region31: #{router_classifier_forward.1} parent=11 // pred_region
          _
        $region32: #{router_classifier_forward.1} parent=11 // pred_fallthru
          _
        // Predicated region
        $region33: #{router_classifier_forward.1} parent=11 // pred_check
          %p344 = pneg %p146
        $region34: #{router_classifier_forward.1} parent=11 // pred_check_branch
          %346 = sbr.rel (%p344) target = $region36
        $region35: #{router_classifier_forward.1} parent=11 // pred_region
          _
        $region36: #{router_classifier_forward.1} parent=11 // pred_fallthru
          _
        // Predicated region
        $region37: #{router_classifier_forward.1} parent=11 // pred_check
          %p347 = pneg %p167
        $region38: #{router_classifier_forward.1} parent=11 // pred_check_branch
          %349 = sbr.rel (%p347) target = $region40
        $region39: #{router_classifier_forward.1} parent=11 // pred_region
          _
        $region40: #{router_classifier_forward.1} parent=11 // pred_fallthru
          _
        // Predicated region
        $region41: #{router_classifier_forward.1} parent=11 // pred_check
          %p350 = pneg %p188
        $region42: #{router_classifier_forward.1} parent=11 // pred_check_branch
          %352 = sbr.rel (%p350) target = $region44
        $region43: #{router_classifier_forward.1} parent=11 // pred_region
          _
        $region44: #{router_classifier_forward.1} parent=11 // pred_fallthru
          _
        // Predicated region
        $region45: #{router_classifier_forward.1} parent=11 // pred_check
          %p353 = pneg %p209
        $region46: #{router_classifier_forward.1} parent=11 // pred_check_branch
          %355 = sbr.rel (%p353) target = $region48
        $region47: #{router_classifier_forward.1} parent=11 // pred_region
          _
        $region48: #{router_classifier_forward.1} parent=11 // pred_fallthru
          _
        // Predicated region
        $region49: #{router_classifier_forward.1} parent=11 // pred_check
          %p356 = pneg %p230
        $region50: #{router_classifier_forward.1} parent=11 // pred_check_branch
          %358 = sbr.rel (%p356) target = $region52
        $region51: #{router_classifier_forward.1} parent=11 // pred_region
          _
        $region52: #{router_classifier_forward.1} parent=11 // pred_fallthru
          _
        // Predicated region
        $region53: #{router_classifier_forward.1} parent=11 // pred_check
          %p359 = pneg %p251
        $region54: #{router_classifier_forward.1} parent=11 // pred_check_branch
          %361 = sbr.rel (%p359) target = $region56
        $region55: #{router_classifier_forward.1} parent=11 // pred_region
          _
        $region56: #{router_classifier_forward.1} parent=11 // pred_fallthru
          _
        // Predicated region
        $region57: #{router_classifier_forward.1} parent=11 // pred_check
          %p362 = pneg %p272
        $region58: #{router_classifier_forward.1} parent=11 // pred_check_branch
          %364 = sbr.rel (%p362) target = $region60
        $region59: #{router_classifier_forward.1} parent=11 // pred_region
          _
        $region60: #{router_classifier_forward.1} parent=11 // pred_fallthru
          _
        // Predicated region
        $region61: #{router_classifier_forward.1} parent=11 // pred_check
          %p365 = pneg %p293
        $region62: #{router_classifier_forward.1} parent=11 // pred_check_branch
          %367 = sbr.rel (%p365) target = $region64
        $region63: #{router_classifier_forward.1} parent=11 // pred_region
          _
        $region64: #{router_classifier_forward.1} parent=11 // pred_fallthru
          _
      $region12: #{router_classifier_forward.1} parent=5 // pred_fallthru
        _
      %p368 = scmp.lt.s32.totalorder %s20, 2
      // Predicated region
      $region65: #{router_classifier_forward.1} parent=5 // pred_check
        %p369 = pneg %p368
      $region66: #{router_classifier_forward.1} parent=5 // pred_check_branch
        %371 = sbr.rel (%p369) target = $region68
      $region67: #{router_classifier_forward.1} parent=5 // pred_region
        _
      $region68: #{router_classifier_forward.1} parent=5 // pred_fallthru
        _
      %p372 = scmp.le.s32.totalorder 1, %s20
      %p373 = scmp.lt.s32.totalorder %s20, 3
      %p374 = pnand %p372, %p373
      %p375 = pneg %p374
      // Predicated region
      $region69: #{router_classifier_forward.1} parent=5 // pred_check
        _
      $region70: #{router_classifier_forward.1} parent=5 // pred_check_branch
        %377 = sbr.rel (%p374) target = $region72
      $region71: #{router_classifier_forward.1} parent=5 // pred_region
        %s378 = ssub.s32 %s20, 1
        %p379 = pneg %p41
        %p380 = pneg %p38
        %p381 = pneg %p62
        %p382 = pneg %p59
        %p383 = pneg %p83
        %p384 = pneg %p80
        %p385 = pneg %p104
        %p386 = pneg %p101
        %p387 = pneg %p125
        %p388 = pneg %p122
        %p389 = pneg %p146
        %p390 = pneg %p143
        %p391 = pneg %p167
        %p392 = pneg %p164
        %p393 = pneg %p188
        %p394 = pneg %p185
        %p395 = pneg %p209
        %p396 = pneg %p206
        %p397 = pneg %p230
        %p398 = pneg %p227
        %p399 = pneg %p251
        %p400 = pneg %p248
        %p401 = pneg %p272
        %p402 = pneg %p269
        %p403 = pneg %p293
        %p404 = pneg %p290
        %p405 = pneg %p314
        %p406 = pneg %p311
        %p408 = scmp.eq.s32.totalorder %s25, 0
        // Predicated region
        $region73: #{router_classifier_forward.1} parent=71 // pred_check
          %p409 = pneg %p408
        $region74: #{router_classifier_forward.1} parent=71 // pred_check_branch
          %411 = sbr.rel (%p409) target = $region76
        $region75: #{router_classifier_forward.1} parent=71 // pred_region
          %v412 = vld [vmem:[%s0] sm:$0xff]
          %v413 = vld [vmem:[%s0 + $0x8] sm:$0xff]
          %vm414 = vcmask 261120
          %415 = vst.msk [vmem:[#allocation2] sm:$0xff] %vm414, %v412
          %416 = vst.msk [vmem:[#allocation2 + $0x8] sm:$0xff] %vm414, %v413
        $region76: #{router_classifier_forward.1} parent=71 // pred_fallthru
          _
        %v417 = vld [vmem:[#allocation2] sm:$0xff]
        %v418 = vld [vmem:[#allocation2 + $0x8] sm:$0xff]
        %v419 = vpack.c.bf16 %v418, %v417
        %v420 = vlaneseq
        %v421 = vshrl.u32 %v420, 7
        %v422 = vadd.s32 %v421, 8
        %v423 = vlaneseq
        %v424 = vand.u32 %v423, 127
        %v425 = vxor.u32 %v421, %v424
        %v426 = vxor.u32 %v422, %v424
        %v427 = vand.u32 %v425, 4294967288
        %v428 = vand.u32 %v426, 4294967288
        %vm429 = vcmp.eq.s32.totalorder %v427, 0
        %vm430 = vcmp.eq.s32.totalorder %v428, 0
        %v431 = vld [vmem:[%s1] sm:$0x1]
        %vm432 = vcmp.gt.f32.partialorder %v431, 0.5
        %v433 = vsel %vm432, 1, 0
        %v434 = vlaneseq
        %v435 = vshrl.u32 %v434, 7
        %v436 = vsub.s32 0, %v435
        %v437 = vrot.slane %v433, %v436
        %vm438 = vcmp.eq.s32.totalorder %v437, 1
        %vm439 = vmand %vm429, %vm438
        %vm440 = vmand %vm430, %vm438
        %v441 = vsel %vm439, 0.0, -1e+09
        %v442 = vsel %vm440, 0.0, -1e+09
        %s443 = smul.u32 %s25, 4
        %s444 = smul.addr %s443, 4
        %s445 = scalar_lea.vmem %s2, %s444
        %v446 = vld [vmem:[%s445] sm:$0xf]
        %v447 = vld [vmem:[%s445 + $0x4] sm:$0xf]
        %v448 = vld [vmem:[%s445 + $0x8] sm:$0xf]
        %v449 = vld [vmem:[%s445 + $0xc] sm:$0xf]
        %s450 = scalar_lea.vmem %s3, %s25
        %v451 = vld [vmem:[%s450] sm:$0x1]
        %v453 = vlaneseq
        %v454 = vshrl.u32 %v453, 7
        %v455 = vsub.s32 0, %v454
        %v456 = vrot.slane %v451, %v455
        %v462 = vunpack.c.l.b16 %v446
        %v463 = vunpack.c.l.b16 %v447
        %v464 = vunpack.c.l.b16 %v448
        %v465 = vunpack.c.l.b16 %v449
        %v466 = vpack.c.b16 %v463, %v462
        %v467 = vpack.c.b16 %v465, %v464
        %vm470 = vcmask 261120
        %v472 = vsel %vm470, %v419, 0
        %474 = vmatprep.subr.bf16.mxu0 0
        %475 = vmatpush1.bf16.msra.mxu0 %v466
        %476 = vmatprep.subr.bf16.mxu0 0
        %477 = vmatpush1.bf16.msra.mxu0 %v467
        %478 = vmatprep.subr.bf16.mxu0 0
        %479 = vmatpush1.bf16.msra.mxu0 0
        %480 = vmatprep.subr.bf16.mxu0 0
        %481 = vmatpush1.bf16.msra.mxu0 0
        %482 = vmatprep.subr.bf16.mxu0 0
        %483 = vmatpush1.bf16.msra.mxu0 0
        %484 = vmatprep.subr.bf16.mxu0 0
        %485 = vmatpush1.bf16.msra.mxu0 0
        %486 = vmatprep.subr.bf16.mxu0 0
        %487 = vmatpush1.bf16.msra.mxu0 0
        %488 = vmatprep.subr.bf16.mxu0 0
        %489 = vmatpush1.bf16.msra.mxu0 0
        %490 = vmatprep.subr.bf16.mxu0 0
        %491 = vmatpush1.bf16.msra.mxu0 0
        %492 = vmatprep.subr.bf16.mxu0 0
        %493 = vmatpush1.bf16.msra.mxu0 0
        %494 = vmatprep.subr.bf16.mxu0 0
        %495 = vmatpush1.bf16.msra.mxu0 0
        %496 = vmatprep.subr.bf16.mxu0 0
        %497 = vmatpush1.bf16.msra.mxu0 0
        %498 = vmatprep.subr.bf16.mxu0 0
        %499 = vmatpush1.bf16.msra.mxu0 0
        %500 = vmatprep.subr.bf16.mxu0 0
        %501 = vmatpush1.bf16.msra.mxu0 0
        %502 = vmatprep.subr.bf16.mxu0 0
        %503 = vmatpush1.bf16.msra.mxu0 0
        %504 = vmatprep.subr.bf16.mxu0 0
        %505 = vmatpush1.bf16.msra.mxu0 0
        %506 = vmatprep.mubr.bf16.mxu0 0
        %507 = vmatmul.mubr.bf16.gmra.mrb[0].mxu0 %v472
        %v508 = vpop.f32.mrb[0].mxu0
        %v509 = vadd.f32 %v456, %v508
        %v510 = vpop.f32.mrb[0].mxu0
        %v511 = vpop.f32.mrb[0].mxu0
        %v512 = vadd.f32 %v456, %v511
        %v513 = vpop.f32.mrb[0].mxu0
        %514 = vdwg.mxu0
        %s515 = smul.addr %s443, 4
        %s516 = scalar_lea.vmem %s4, %s515
        %v517 = vld [vmem:[%s516] sm:$0xf]
        %v518 = vld [vmem:[%s516 + $0x4] sm:$0xf]
        %v519 = vld [vmem:[%s516 + $0x8] sm:$0xf]
        %v520 = vld [vmem:[%s516 + $0xc] sm:$0xf]
        %v521 = vpack.c.bf16 %v512, %v509
        %523 = vrot.lane.b32.xlu0 %v521, 96
        %v524 = vpop.permute.xlu0 %523
        %vm525 = vcmask 64512
        %v527 = vsel %vm525, %v521, 0
        %v530 = vsel %vm525, %v524, 0
        %532 = vmatprep.subr.bf16.mxu0 0
        %533 = vmatpush1.bf16.xpose.msra.mxu0 %v530
        %534 = vmatprep.subr.bf16.mxu0 0
        %535 = vmatpush1.bf16.xpose.msra.mxu0 0
        %536 = vmatprep.subr.bf16.mxu0 0
        %537 = vmatpush1.bf16.xpose.msra.mxu0 0
        %538 = vmatprep.subr.bf16.mxu0 0
        %539 = vmatpush1.bf16.xpose.msra.mxu0 0
        %540 = vmatprep.subr.bf16.mxu0 0
        %541 = vmatpush1.bf16.xpose.msra.mxu0 0
        %542 = vmatprep.subr.bf16.mxu0 0
        %543 = vmatpush1.bf16.xpose.msra.mxu0 0
        %544 = vmatprep.subr.bf16.mxu0 0
        %545 = vmatpush1.bf16.xpose.msra.mxu0 0
        %546 = vmatprep.subr.bf16.mxu0 0
        %547 = vmatpush1.bf16.xpose.msra.mxu0 0
        %548 = vmatprep.subr.bf16.mxu0 0
        %549 = vmatpush1.bf16.xpose.msra.mxu0 0
        %550 = vmatprep.subr.bf16.mxu0 0
        %551 = vmatpush1.bf16.xpose.msra.mxu0 0
        %552 = vmatprep.subr.bf16.mxu0 0
        %553 = vmatpush1.bf16.xpose.msra.mxu0 0
        %554 = vmatprep.subr.bf16.mxu0 0
        %555 = vmatpush1.bf16.xpose.msra.mxu0 0
        %556 = vmatprep.subr.bf16.mxu0 0
        %557 = vmatpush1.bf16.xpose.msra.mxu0 0
        %558 = vmatprep.subr.bf16.mxu0 0
        %559 = vmatpush1.bf16.xpose.msra.mxu0 0
        %560 = vmatprep.subr.bf16.mxu0 0
        %561 = vmatpush1.bf16.xpose.msra.mxu0 0
        %562 = vmatprep.subr.bf16.mxu0 0
        %563 = vmatpush1.bf16.xpose.msra.mxu0 0
        %564 = vmatprep.mubr.bf16.mxu0 0
        %565 = vmatmul.mubr.bf16.gmra.mrb[0].mxu0 %v527
        %v566 = vpop.f32.mrb[0].mxu0
        %v567 = vadd.f32 0.0, %v566
        %v568 = vpop.f32.mrb[0].mxu0
        %v569 = vpop.f32.mrb[0].mxu0
        %v570 = vadd.f32 0.0, %v569
        %v571 = vpop.f32.mrb[0].mxu0
        %572 = vdwg.mxu0
        %v573 = vmul.f32 %v567, 0.35355338
        %v574 = vmul.f32 %v570, 0.35355338
        %v575 = vadd.f32 %v573, %v441
        %v576 = vadd.f32 %v574, %v442
        %vm577 = vcmask 130048
        %v578 = vsel %vm577, %v575, -inf
        %579 = vmax.xlane.f32.xlu0 %v578
        %v580 = vpop.xlane.xlu0 %579
        %v581 = vsel %vm577, %v576, -inf
        %582 = vmax.xlane.f32.xlu0 %v581
        %v583 = vpop.xlane.xlu0 %582
        %v584 = vsub.f32 %v575, %v580
        %v585 = vsub.f32 %v576, %v583
        %v586 = vmul.f32 %v584, 1.442695
        %v587 = vpow.pop %v586
        %v588 = vmul.f32 %v585, 1.442695
        %v589 = vpow.pop %v588
        %v590 = vsel %vm577, %v587, 0.0
        %591 = vadd.xlane.f32.xlu0 %v590
        %v592 = vpop.xlane.xlu0 %591
        %v593 = vsel %vm577, %v589, 0.0
        %594 = vadd.xlane.f32.xlu0 %v593
        %v595 = vpop.xlane.xlu0 %594
        %v596 = vrcp.pop %v592
        %v597 = vrcp.pop %v595
        %v598 = vmul.f32 %v587, %v596
        %v599 = vmul.f32 %v589, %v597
        %v600 = vpack.c.bf16 %v599, %v598
        %601 = vrot.lane.b32.xlu0 %v521, 64
        %v602 = vpop.permute.xlu0 %601
        %v605 = vsel %vm577, %v600, 0
        %607 = vmatprep.subr.bf16.mxu0 0
        %608 = vmatpush1.bf16.msra.mxu0 %v602
        %609 = vmatprep.subr.bf16.mxu0 0
        %610 = vmatpush1.bf16.msra.mxu0 0
        %611 = vmatprep.subr.bf16.mxu0 0
        %612 = vmatpush1.bf16.msra.mxu0 0
        %613 = vmatprep.subr.bf16.mxu0 0
        %614 = vmatpush1.bf16.msra.mxu0 0
        %615 = vmatprep.subr.bf16.mxu0 0
        %616 = vmatpush1.bf16.msra.mxu0 0
        %617 = vmatprep.subr.bf16.mxu0 0
        %618 = vmatpush1.bf16.msra.mxu0 0
        %619 = vmatprep.subr.bf16.mxu0 0
        %620 = vmatpush1.bf16.msra.mxu0 0
        %621 = vmatprep.subr.bf16.mxu0 0
        %622 = vmatpush1.bf16.msra.mxu0 0
        %623 = vmatprep.subr.bf16.mxu0 0
        %624 = vmatpush1.bf16.msra.mxu0 0
        %625 = vmatprep.subr.bf16.mxu0 0
        %626 = vmatpush1.bf16.msra.mxu0 0
        %627 = vmatprep.subr.bf16.mxu0 0
        %628 = vmatpush1.bf16.msra.mxu0 0
        %629 = vmatprep.subr.bf16.mxu0 0
        %630 = vmatpush1.bf16.msra.mxu0 0
        %631 = vmatprep.subr.bf16.mxu0 0
        %632 = vmatpush1.bf16.msra.mxu0 0
        %633 = vmatprep.subr.bf16.mxu0 0
        %634 = vmatpush1.bf16.msra.mxu0 0
        %635 = vmatprep.subr.bf16.mxu0 0
        %636 = vmatpush1.bf16.msra.mxu0 0
        %637 = vmatprep.subr.bf16.mxu0 0
        %638 = vmatpush1.bf16.msra.mxu0 0
        %639 = vmatprep.mubr.bf16.mxu0 0
        %640 = vmatmul.mubr.bf16.gmra.mrb[0].mxu0 %v605
        %v641 = vpop.f32.mrb[0].mxu0
        %v642 = vadd.f32 0.0, %v641
        %v643 = vpop.f32.mrb[0].mxu0
        %v644 = vpop.f32.mrb[0].mxu0
        %v645 = vadd.f32 0.0, %v644
        %v646 = vpop.f32.mrb[0].mxu0
        %647 = vdwg.mxu0
        %v648 = vpack.c.bf16 %v645, %v642
        %649 = vrot.lane.b32.xlu0 %v521, 120
        %v650 = vpop.permute.xlu0 %649
        %651 = vrot.lane.b32.xlu0 %v521, 88
        %v652 = vpop.permute.xlu0 %651
        %v654 = vsel %vm525, %v650, 0
        %v657 = vsel %vm525, %v652, 0
        %659 = vmatprep.subr.bf16.mxu0 0
        %660 = vmatpush1.bf16.xpose.msra.mxu0 %v657
        %661 = vmatprep.subr.bf16.mxu0 0
        %662 = vmatpush1.bf16.xpose.msra.mxu0 0
        %663 = vmatprep.subr.bf16.mxu0 0
        %664 = vmatpush1.bf16.xpose.msra.mxu0 0
        %665 = vmatprep.subr.bf16.mxu0 0
        %666 = vmatpush1.bf16.xpose.msra.mxu0 0
        %667 = vmatprep.subr.bf16.mxu0 0
        %668 = vmatpush1.bf16.xpose.msra.mxu0 0
        %669 = vmatprep.subr.bf16.mxu0 0
        %670 = vmatpush1.bf16.xpose.msra.mxu0 0
        %671 = vmatprep.subr.bf16.mxu0 0
        %672 = vmatpush1.bf16.xpose.msra.mxu0 0
        %673 = vmatprep.subr.bf16.mxu0 0
        %674 = vmatpush1.bf16.xpose.msra.mxu0 0
        %675 = vmatprep.subr.bf16.mxu0 0
        %676 = vmatpush1.bf16.xpose.msra.mxu0 0
        %677 = vmatprep.subr.bf16.mxu0 0
        %678 = vmatpush1.bf16.xpose.msra.mxu0 0
        %679 = vmatprep.subr.bf16.mxu0 0
        %680 = vmatpush1.bf16.xpose.msra.mxu0 0
        %681 = vmatprep.subr.bf16.mxu0 0
        %682 = vmatpush1.bf16.xpose.msra.mxu0 0
        %683 = vmatprep.subr.bf16.mxu0 0
        %684 = vmatpush1.bf16.xpose.msra.mxu0 0
        %685 = vmatprep.subr.bf16.mxu0 0
        %686 = vmatpush1.bf16.xpose.msra.mxu0 0
        %687 = vmatprep.subr.bf16.mxu0 0
        %688 = vmatpush1.bf16.xpose.msra.mxu0 0
        %689 = vmatprep.subr.bf16.mxu0 0
        %690 = vmatpush1.bf16.xpose.msra.mxu0 0
        %691 = vmatprep.mubr.bf16.mxu0 0
        %692 = vmatmul.mubr.bf16.gmra.mrb[0].mxu0 %v654
        %v693 = vpop.f32.mrb[0].mxu0
        %v694 = vadd.f32 0.0, %v693
        %v695 = vpop.f32.mrb[0].mxu0
        %v696 = vpop.f32.mrb[0].mxu0
        %v697 = vadd.f32 0.0, %v696
        %v698 = vpop.f32.mrb[0].mxu0
        %699 = vdwg.mxu0
        %v700 = vmul.f32 %v694, 0.35355338
        %v701 = vmul.f32 %v697, 0.35355338
        %v702 = vadd.f32 %v700, %v441
        %v703 = vadd.f32 %v701, %v442
        %v704 = vsel %vm577, %v702, -inf
        %705 = vmax.xlane.f32.xlu0 %v704
        %v706 = vpop.xlane.xlu0 %705
        %v707 = vsel %vm577, %v703, -inf
        %708 = vmax.xlane.f32.xlu0 %v707
        %v709 = vpop.xlane.xlu0 %708
        %v710 = vsub.f32 %v702, %v706
        %v711 = vsub.f32 %v703, %v709
        %v712 = vmul.f32 %v710, 1.442695
        %v713 = vpow.pop %v712
        %v714 = vmul.f32 %v711, 1.442695
        %v715 = vpow.pop %v714
        %v716 = vsel %vm577, %v713, 0.0
        %717 = vadd.xlane.f32.xlu0 %v716
        %v718 = vpop.xlane.xlu0 %717
        %v719 = vsel %vm577, %v715, 0.0
        %720 = vadd.xlane.f32.xlu0 %v719
        %v721 = vpop.xlane.xlu0 %720
        %v722 = vrcp.pop %v718
        %v723 = vrcp.pop %v721
        %v724 = vmul.f32 %v713, %v722
        %v725 = vmul.f32 %v715, %v723
        %v726 = vpack.c.bf16 %v725, %v724
        %727 = vrot.lane.b32.xlu0 %v521, 56
        %v728 = vpop.permute.xlu0 %727
        %v731 = vsel %vm577, %v726, 0
        %733 = vmatprep.subr.bf16.mxu0 0
        %734 = vmatpush1.bf16.msra.mxu0 %v728
        %735 = vmatprep.subr.bf16.mxu0 0
        %736 = vmatpush1.bf16.msra.mxu0 0
        %737 = vmatprep.subr.bf16.mxu0 0
        %738 = vmatpush1.bf16.msra.mxu0 0
        %739 = vmatprep.subr.bf16.mxu0 0
        %740 = vmatpush1.bf16.msra.mxu0 0
        %741 = vmatprep.subr.bf16.mxu0 0
        %742 = vmatpush1.bf16.msra.mxu0 0
        %743 = vmatprep.subr.bf16.mxu0 0
        %744 = vmatpush1.bf16.msra.mxu0 0
        %745 = vmatprep.subr.bf16.mxu0 0
        %746 = vmatpush1.bf16.msra.mxu0 0
        %747 = vmatprep.subr.bf16.mxu0 0
        %748 = vmatpush1.bf16.msra.mxu0 0
        %749 = vmatprep.subr.bf16.mxu0 0
        %750 = vmatpush1.bf16.msra.mxu0 0
        %751 = vmatprep.subr.bf16.mxu0 0
        %752 = vmatpush1.bf16.msra.mxu0 0
        %753 = vmatprep.subr.bf16.mxu0 0
        %754 = vmatpush1.bf16.msra.mxu0 0
        %755 = vmatprep.subr.bf16.mxu0 0
        %756 = vmatpush1.bf16.msra.mxu0 0
        %757 = vmatprep.subr.bf16.mxu0 0
        %758 = vmatpush1.bf16.msra.mxu0 0
        %759 = vmatprep.subr.bf16.mxu0 0
        %760 = vmatpush1.bf16.msra.mxu0 0
        %761 = vmatprep.subr.bf16.mxu0 0
        %762 = vmatpush1.bf16.msra.mxu0 0
        %763 = vmatprep.subr.bf16.mxu0 0
        %764 = vmatpush1.bf16.msra.mxu0 0
        %765 = vmatprep.mubr.bf16.mxu0 0
        %766 = vmatmul.mubr.bf16.gmra.mrb[0].mxu0 %v731
        %v767 = vpop.f32.mrb[0].mxu0
        %v768 = vadd.f32 0.0, %v767
        %v769 = vpop.f32.mrb[0].mxu0
        %v770 = vpop.f32.mrb[0].mxu0
        %v771 = vadd.f32 0.0, %v770
        %v772 = vpop.f32.mrb[0].mxu0
        %773 = vdwg.mxu0
        %v774 = vpack.c.bf16 %v771, %v768
        %v776 = vsel %vm525, %v774, 0
        %vm778 = vcmask 1043456
        %v780 = vsel %vm778, %v518, 0
        %782 = vmatprep.subr.bf16.mxu0 0
        %783 = vmatpush1.bf16.msra.mxu0 %v780
        %784 = vmatprep.subr.bf16.mxu0 0
        %785 = vmatpush1.bf16.msra.mxu0 0
        %786 = vmatprep.subr.bf16.mxu0 0
        %787 = vmatpush1.bf16.msra.mxu0 0
        %788 = vmatprep.subr.bf16.mxu0 0
        %789 = vmatpush1.bf16.msra.mxu0 0
        %790 = vmatprep.subr.bf16.mxu0 0
        %791 = vmatpush1.bf16.msra.mxu0 0
        %792 = vmatprep.subr.bf16.mxu0 0
        %793 = vmatpush1.bf16.msra.mxu0 0
        %794 = vmatprep.subr.bf16.mxu0 0
        %795 = vmatpush1.bf16.msra.mxu0 0
        %796 = vmatprep.subr.bf16.mxu0 0
        %797 = vmatpush1.bf16.msra.mxu0 0
        %798 = vmatprep.subr.bf16.mxu0 0
        %799 = vmatpush1.bf16.msra.mxu0 0
        %800 = vmatprep.subr.bf16.mxu0 0
        %801 = vmatpush1.bf16.msra.mxu0 0
        %802 = vmatprep.subr.bf16.mxu0 0
        %803 = vmatpush1.bf16.msra.mxu0 0
        %804 = vmatprep.subr.bf16.mxu0 0
        %805 = vmatpush1.bf16.msra.mxu0 0
        %806 = vmatprep.subr.bf16.mxu0 0
        %807 = vmatpush1.bf16.msra.mxu0 0
        %808 = vmatprep.subr.bf16.mxu0 0
        %809 = vmatpush1.bf16.msra.mxu0 0
        %810 = vmatprep.subr.bf16.mxu0 0
        %811 = vmatpush1.bf16.msra.mxu0 0
        %812 = vmatprep.subr.bf16.mxu0 0
        %813 = vmatpush1.bf16.msra.mxu0 0
        %814 = vmatprep.mubr.bf16.mxu0 0
        %815 = vmatmul.mubr.bf16.gmra.mrb[0].mxu0 %v776
        %v816 = vpop.f32.mrb[0].mxu0
        %v817 = vadd.f32 0.0, %v816
        %v818 = vpop.f32.mrb[0].mxu0
        %v819 = vpop.f32.mrb[0].mxu0
        %v820 = vadd.f32 0.0, %v819
        %v821 = vpop.f32.mrb[0].mxu0
        %822 = vdwg.mxu0
        %v824 = vsel %vm525, %v648, 0
        %v827 = vsel %vm778, %v517, 0
        %829 = vmatprep.subr.bf16.mxu0 0
        %830 = vmatpush1.bf16.msra.mxu0 %v827
        %831 = vmatprep.subr.bf16.mxu0 0
        %832 = vmatpush1.bf16.msra.mxu0 0
        %833 = vmatprep.subr.bf16.mxu0 0
        %834 = vmatpush1.bf16.msra.mxu0 0
        %835 = vmatprep.subr.bf16.mxu0 0
        %836 = vmatpush1.bf16.msra.mxu0 0
        %837 = vmatprep.subr.bf16.mxu0 0
        %838 = vmatpush1.bf16.msra.mxu0 0
        %839 = vmatprep.subr.bf16.mxu0 0
        %840 = vmatpush1.bf16.msra.mxu0 0
        %841 = vmatprep.subr.bf16.mxu0 0
        %842 = vmatpush1.bf16.msra.mxu0 0
        %843 = vmatprep.subr.bf16.mxu0 0
        %844 = vmatpush1.bf16.msra.mxu0 0
        %845 = vmatprep.subr.bf16.mxu0 0
        %846 = vmatpush1.bf16.msra.mxu0 0
        %847 = vmatprep.subr.bf16.mxu0 0
        %848 = vmatpush1.bf16.msra.mxu0 0
        %849 = vmatprep.subr.bf16.mxu0 0
        %850 = vmatpush1.bf16.msra.mxu0 0
        %851 = vmatprep.subr.bf16.mxu0 0
        %852 = vmatpush1.bf16.msra.mxu0 0
        %853 = vmatprep.subr.bf16.mxu0 0
        %854 = vmatpush1.bf16.msra.mxu0 0
        %855 = vmatprep.subr.bf16.mxu0 0
        %856 = vmatpush1.bf16.msra.mxu0 0
        %857 = vmatprep.subr.bf16.mxu0 0
        %858 = vmatpush1.bf16.msra.mxu0 0
        %859 = vmatprep.subr.bf16.mxu0 0
        %860 = vmatpush1.bf16.msra.mxu0 0
        %861 = vmatprep.mubr.bf16.mxu0 0
        %862 = vmatmul.mubr.bf16.gmra.mrb[0].mxu0 %v824
        %v863 = vpop.f32.mrb[0].mxu0
        %v864 = vadd.f32 %v817, %v863
        %v865 = vpop.f32.mrb[0].mxu0
        %v866 = vpop.f32.mrb[0].mxu0
        %v867 = vadd.f32 %v820, %v866
        %v868 = vpop.f32.mrb[0].mxu0
        %869 = vdwg.mxu0
        %870 = vrot.lane.b32.xlu0 %v521, 112
        %v871 = vpop.permute.xlu0 %870
        %872 = vrot.lane.b32.xlu0 %v521, 80
        %v873 = vpop.permute.xlu0 %872
        %v875 = vsel %vm525, %v871, 0
        %v878 = vsel %vm525, %v873, 0
        %880 = vmatprep.subr.bf16.mxu0 0
        %881 = vmatpush1.bf16.xpose.msra.mxu0 %v878
        %882 = vmatprep.subr.bf16.mxu0 0
        %883 = vmatpush1.bf16.xpose.msra.mxu0 0
        %884 = vmatprep.subr.bf16.mxu0 0
        %885 = vmatpush1.bf16.xpose.msra.mxu0 0
        %886 = vmatprep.subr.bf16.mxu0 0
        %887 = vmatpush1.bf16.xpose.msra.mxu0 0
        %888 = vmatprep.subr.bf16.mxu0 0
        %889 = vmatpush1.bf16.xpose.msra.mxu0 0
        %890 = vmatprep.subr.bf16.mxu0 0
        %891 = vmatpush1.bf16.xpose.msra.mxu0 0
        %892 = vmatprep.subr.bf16.mxu0 0
        %893 = vmatpush1.bf16.xpose.msra.mxu0 0
        %894 = vmatprep.subr.bf16.mxu0 0
        %895 = vmatpush1.bf16.xpose.msra.mxu0 0
        %896 = vmatprep.subr.bf16.mxu0 0
        %897 = vmatpush1.bf16.xpose.msra.mxu0 0
        %898 = vmatprep.subr.bf16.mxu0 0
        %899 = vmatpush1.bf16.xpose.msra.mxu0 0
        %900 = vmatprep.subr.bf16.mxu0 0
        %901 = vmatpush1.bf16.xpose.msra.mxu0 0
        %902 = vmatprep.subr.bf16.mxu0 0
        %903 = vmatpush1.bf16.xpose.msra.mxu0 0
        %904 = vmatprep.subr.bf16.mxu0 0
        %905 = vmatpush1.bf16.xpose.msra.mxu0 0
        %906 = vmatprep.subr.bf16.mxu0 0
        %907 = vmatpush1.bf16.xpose.msra.mxu0 0
        %908 = vmatprep.subr.bf16.mxu0 0
        %909 = vmatpush1.bf16.xpose.msra.mxu0 0
        %910 = vmatprep.subr.bf16.mxu0 0
        %911 = vmatpush1.bf16.xpose.msra.mxu0 0
        %912 = vmatprep.mubr.bf16.mxu0 0
        %913 = vmatmul.mubr.bf16.gmra.mrb[0].mxu0 %v875
        %v914 = vpop.f32.mrb[0].mxu0
        %v915 = vadd.f32 0.0, %v914
        %v916 = vpop.f32.mrb[0].mxu0
        %v917 = vpop.f32.mrb[0].mxu0
        %v918 = vadd.f32 0.0, %v917
        %v919 = vpop.f32.mrb[0].mxu0
        %920 = vdwg.mxu0
        %v921 = vmul.f32 %v915, 0.35355338
        %v922 = vmul.f32 %v918, 0.35355338
        %v923 = vadd.f32 %v921, %v441
        %v924 = vadd.f32 %v922, %v442
        %v925 = vsel %vm577, %v923, -inf
        %926 = vmax.xlane.f32.xlu0 %v925
        %v927 = vpop.xlane.xlu0 %926
        %v928 = vsel %vm577, %v924, -inf
        %929 = vmax.xlane.f32.xlu0 %v928
        %v930 = vpop.xlane.xlu0 %929
        %v931 = vsub.f32 %v923, %v927
        %v932 = vsub.f32 %v924, %v930
        %v933 = vmul.f32 %v931, 1.442695
        %v934 = vpow.pop %v933
        %v935 = vmul.f32 %v932, 1.442695
        %v936 = vpow.pop %v935
        %v937 = vsel %vm577, %v934, 0.0
        %938 = vadd.xlane.f32.xlu0 %v937
        %v939 = vpop.xlane.xlu0 %938
        %v940 = vsel %vm577, %v936, 0.0
        %941 = vadd.xlane.f32.xlu0 %v940
        %v942 = vpop.xlane.xlu0 %941
        %v943 = vrcp.pop %v939
        %v944 = vrcp.pop %v942
        %v945 = vmul.f32 %v934, %v943
        %v946 = vmul.f32 %v936, %v944
        %v947 = vpack.c.bf16 %v946, %v945
        %948 = vrot.lane.b32.xlu0 %v521, 48
        %v949 = vpop.permute.xlu0 %948
        %v952 = vsel %vm577, %v947, 0
        %954 = vmatprep.subr.bf16.mxu0 0
        %955 = vmatpush1.bf16.msra.mxu0 %v949
        %956 = vmatprep.subr.bf16.mxu0 0
        %957 = vmatpush1.bf16.msra.mxu0 0
        %958 = vmatprep.subr.bf16.mxu0 0
        %959 = vmatpush1.bf16.msra.mxu0 0
        %960 = vmatprep.subr.bf16.mxu0 0
        %961 = vmatpush1.bf16.msra.mxu0 0
        %962 = vmatprep.subr.bf16.mxu0 0
        %963 = vmatpush1.bf16.msra.mxu0 0
        %964 = vmatprep.subr.bf16.mxu0 0
        %965 = vmatpush1.bf16.msra.mxu0 0
        %966 = vmatprep.subr.bf16.mxu0 0
        %967 = vmatpush1.bf16.msra.mxu0 0
        %968 = vmatprep.subr.bf16.mxu0 0
        %969 = vmatpush1.bf16.msra.mxu0 0
        %970 = vmatprep.subr.bf16.mxu0 0
        %971 = vmatpush1.bf16.msra.mxu0 0
        %972 = vmatprep.subr.bf16.mxu0 0
        %973 = vmatpush1.bf16.msra.mxu0 0
        %974 = vmatprep.subr.bf16.mxu0 0
        %975 = vmatpush1.bf16.msra.mxu0 0
        %976 = vmatprep.subr.bf16.mxu0 0
        %977 = vmatpush1.bf16.msra.mxu0 0
        %978 = vmatprep.subr.bf16.mxu0 0
        %979 = vmatpush1.bf16.msra.mxu0 0
        %980 = vmatprep.subr.bf16.mxu0 0
        %981 = vmatpush1.bf16.msra.mxu0 0
        %982 = vmatprep.subr.bf16.mxu0 0
        %983 = vmatpush1.bf16.msra.mxu0 0
        %984 = vmatprep.subr.bf16.mxu0 0
        %985 = vmatpush1.bf16.msra.mxu0 0
        %986 = vmatprep.mubr.bf16.mxu0 0
        %987 = vmatmul.mubr.bf16.gmra.mrb[0].mxu0 %v952
        %v988 = vpop.f32.mrb[0].mxu0
        %v989 = vadd.f32 0.0, %v988
        %v990 = vpop.f32.mrb[0].mxu0
        %v991 = vpop.f32.mrb[0].mxu0
        %v992 = vadd.f32 0.0, %v991
        %v993 = vpop.f32.mrb[0].mxu0
        %994 = vdwg.mxu0
        %v995 = vpack.c.bf16 %v992, %v989
        %v997 = vsel %vm525, %v995, 0
        %v1000 = vsel %vm778, %v519, 0
        %1002 = vmatprep.subr.bf16.mxu0 0
        %1003 = vmatpush1.bf16.msra.mxu0 %v1000
        %1004 = vmatprep.subr.bf16.mxu0 0
        %1005 = vmatpush1.bf16.msra.mxu0 0
        %1006 = vmatprep.subr.bf16.mxu0 0
        %1007 = vmatpush1.bf16.msra.mxu0 0
        %1008 = vmatprep.subr.bf16.mxu0 0
        %1009 = vmatpush1.bf16.msra.mxu0 0
        %1010 = vmatprep.subr.bf16.mxu0 0
        %1011 = vmatpush1.bf16.msra.mxu0 0
        %1012 = vmatprep.subr.bf16.mxu0 0
        %1013 = vmatpush1.bf16.msra.mxu0 0
        %1014 = vmatprep.subr.bf16.mxu0 0
        %1015 = vmatpush1.bf16.msra.mxu0 0
        %1016 = vmatprep.subr.bf16.mxu0 0
        %1017 = vmatpush1.bf16.msra.mxu0 0
        %1018 = vmatprep.subr.bf16.mxu0 0
        %1019 = vmatpush1.bf16.msra.mxu0 0
        %1020 = vmatprep.subr.bf16.mxu0 0
        %1021 = vmatpush1.bf16.msra.mxu0 0
        %1022 = vmatprep.subr.bf16.mxu0 0
        %1023 = vmatpush1.bf16.msra.mxu0 0
        %1024 = vmatprep.subr.bf16.mxu0 0
        %1025 = vmatpush1.bf16.msra.mxu0 0
        %1026 = vmatprep.subr.bf16.mxu0 0
        %1027 = vmatpush1.bf16.msra.mxu0 0
        %1028 = vmatprep.subr.bf16.mxu0 0
        %1029 = vmatpush1.bf16.msra.mxu0 0
        %1030 = vmatprep.subr.bf16.mxu0 0
        %1031 = vmatpush1.bf16.msra.mxu0 0
        %1032 = vmatprep.subr.bf16.mxu0 0
        %1033 = vmatpush1.bf16.msra.mxu0 0
        %1034 = vmatprep.mubr.bf16.mxu0 0
        %1035 = vmatmul.mubr.bf16.gmra.mrb[0].mxu0 %v997
        %v1036 = vpop.f32.mrb[0].mxu0
        %v1037 = vadd.f32 0.0, %v1036
        %v1038 = vpop.f32.mrb[0].mxu0
        %v1039 = vpop.f32.mrb[0].mxu0
        %v1040 = vadd.f32 0.0, %v1039
        %v1041 = vpop.f32.mrb[0].mxu0
        %1042 = vdwg.mxu0
        %v1043 = vadd.f32 %v864, %v1037
        %v1044 = vadd.f32 %v867, %v1040
        %1045 = vrot.lane.b32.xlu0 %v521, 104
        %v1046 = vpop.permute.xlu0 %1045
        %1047 = vrot.lane.b32.xlu0 %v521, 72
        %v1048 = vpop.permute.xlu0 %1047
        %v1050 = vsel %vm525, %v1046, 0
        %v1053 = vsel %vm525, %v1048, 0
        %1055 = vmatprep.subr.bf16.mxu0 0
        %1056 = vmatpush1.bf16.xpose.msra.mxu0 %v1053
        %1057 = vmatprep.subr.bf16.mxu0 0
        %1058 = vmatpush1.bf16.xpose.msra.mxu0 0
        %1059 = vmatprep.subr.bf16.mxu0 0
        %1060 = vmatpush1.bf16.xpose.msra.mxu0 0
        %1061 = vmatprep.subr.bf16.mxu0 0
        %1062 = vmatpush1.bf16.xpose.msra.mxu0 0
        %1063 = vmatprep.subr.bf16.mxu0 0
        %1064 = vmatpush1.bf16.xpose.msra.mxu0 0
        %1065 = vmatprep.subr.bf16.mxu0 0
        %1066 = vmatpush1.bf16.xpose.msra.mxu0 0
        %1067 = vmatprep.subr.bf16.mxu0 0
        %1068 = vmatpush1.bf16.xpose.msra.mxu0 0
        %1069 = vmatprep.subr.bf16.mxu0 0
        %1070 = vmatpush1.bf16.xpose.msra.mxu0 0
        %1071 = vmatprep.subr.bf16.mxu0 0
        %1072 = vmatpush1.bf16.xpose.msra.mxu0 0
        %1073 = vmatprep.subr.bf16.mxu0 0
        %1074 = vmatpush1.bf16.xpose.msra.mxu0 0
        %1075 = vmatprep.subr.bf16.mxu0 0
        %1076 = vmatpush1.bf16.xpose.msra.mxu0 0
        %1077 = vmatprep.subr.bf16.mxu0 0
        %1078 = vmatpush1.bf16.xpose.msra.mxu0 0
        %1079 = vmatprep.subr.bf16.mxu0 0
        %1080 = vmatpush1.bf16.xpose.msra.mxu0 0
        %1081 = vmatprep.subr.bf16.mxu0 0
        %1082 = vmatpush1.bf16.xpose.msra.mxu0 0
        %1083 = vmatprep.subr.bf16.mxu0 0
        %1084 = vmatpush1.bf16.xpose.msra.mxu0 0
        %1085 = vmatprep.subr.bf16.mxu0 0
        %1086 = vmatpush1.bf16.xpose.msra.mxu0 0
        %1087 = vmatprep.mubr.bf16.mxu0 0
        %1088 = vmatmul.mubr.bf16.gmra.mrb[0].mxu0 %v1050
        %v1089 = vpop.f32.mrb[0].mxu0
        %v1090 = vadd.f32 0.0, %v1089
        %v1091 = vpop.f32.mrb[0].mxu0
        %v1092 = vpop.f32.mrb[0].mxu0
        %v1093 = vadd.f32 0.0, %v1092
        %v1094 = vpop.f32.mrb[0].mxu0
        %1095 = vdwg.mxu0
        %v1096 = vmul.f32 %v1090, 0.35355338
        %v1097 = vmul.f32 %v1093, 0.35355338
        %v1098 = vadd.f32 %v1096, %v441
        %v1099 = vadd.f32 %v1097, %v442
        %v1100 = vsel %vm577, %v1098, -inf
        %1101 = vmax.xlane.f32.xlu0 %v1100
        %v1102 = vpop.xlane.xlu0 %1101
        %v1103 = vsel %vm577, %v1099, -inf
        %1104 = vmax.xlane.f32.xlu0 %v1103
        %v1105 = vpop.xlane.xlu0 %1104
        %v1106 = vsub.f32 %v1098, %v1102
        %v1107 = vsub.f32 %v1099, %v1105
        %v1108 = vmul.f32 %v1106, 1.442695
        %v1109 = vpow.pop %v1108
        %v1110 = vmul.f32 %v1107, 1.442695
        %v1111 = vpow.pop %v1110
        %v1112 = vsel %vm577, %v1109, 0.0
        %1113 = vadd.xlane.f32.xlu0 %v1112
        %v1114 = vpop.xlane.xlu0 %1113
        %v1115 = vsel %vm577, %v1111, 0.0
        %1116 = vadd.xlane.f32.xlu0 %v1115
        %v1117 = vpop.xlane.xlu0 %1116
        %v1118 = vrcp.pop %v1114
        %v1119 = vrcp.pop %v1117
        %v1120 = vmul.f32 %v1109, %v1118
        %v1121 = vmul.f32 %v1111, %v1119
        %v1122 = vpack.c.bf16 %v1121, %v1120
        %1123 = vrot.lane.b32.xlu0 %v521, 40
        %v1124 = vpop.permute.xlu0 %1123
        %v1127 = vsel %vm577, %v1122, 0
        %1129 = vmatprep.subr.bf16.mxu0 0
        %1130 = vmatpush1.bf16.msra.mxu0 %v1124
        %1131 = vmatprep.subr.bf16.mxu0 0
        %1132 = vmatpush1.bf16.msra.mxu0 0
        %1133 = vmatprep.subr.bf16.mxu0 0
        %1134 = vmatpush1.bf16.msra.mxu0 0
        %1135 = vmatprep.subr.bf16.mxu0 0
        %1136 = vmatpush1.bf16.msra.mxu0 0
        %1137 = vmatprep.subr.bf16.mxu0 0
        %1138 = vmatpush1.bf16.msra.mxu0 0
        %1139 = vmatprep.subr.bf16.mxu0 0
        %1140 = vmatpush1.bf16.msra.mxu0 0
        %1141 = vmatprep.subr.bf16.mxu0 0
        %1142 = vmatpush1.bf16.msra.mxu0 0
        %1143 = vmatprep.subr.bf16.mxu0 0
        %1144 = vmatpush1.bf16.msra.mxu0 0
        %1145 = vmatprep.subr.bf16.mxu0 0
        %1146 = vmatpush1.bf16.msra.mxu0 0
        %1147 = vmatprep.subr.bf16.mxu0 0
        %1148 = vmatpush1.bf16.msra.mxu0 0
        %1149 = vmatprep.subr.bf16.mxu0 0
        %1150 = vmatpush1.bf16.msra.mxu0 0
        %1151 = vmatprep.subr.bf16.mxu0 0
        %1152 = vmatpush1.bf16.msra.mxu0 0
        %1153 = vmatprep.subr.bf16.mxu0 0
        %1154 = vmatpush1.bf16.msra.mxu0 0
        %1155 = vmatprep.subr.bf16.mxu0 0
        %1156 = vmatpush1.bf16.msra.mxu0 0
        %1157 = vmatprep.subr.bf16.mxu0 0
        %1158 = vmatpush1.bf16.msra.mxu0 0
        %1159 = vmatprep.subr.bf16.mxu0 0
        %1160 = vmatpush1.bf16.msra.mxu0 0
        %1161 = vmatprep.mubr.bf16.mxu0 0
        %1162 = vmatmul.mubr.bf16.gmra.mrb[0].mxu0 %v1127
        %v1163 = vpop.f32.mrb[0].mxu0
        %v1164 = vadd.f32 0.0, %v1163
        %v1165 = vpop.f32.mrb[0].mxu0
        %v1166 = vpop.f32.mrb[0].mxu0
        %v1167 = vadd.f32 0.0, %v1166
        %v1168 = vpop.f32.mrb[0].mxu0
        %1169 = vdwg.mxu0
        %v1170 = vpack.c.bf16 %v1167, %v1164
        %v1172 = vsel %vm525, %v1170, 0
        %v1175 = vsel %vm778, %v520, 0
        %1177 = vmatprep.subr.bf16.mxu0 0
        %1178 = vmatpush1.bf16.msra.mxu0 %v1175
        %1179 = vmatprep.subr.bf16.mxu0 0
        %1180 = vmatpush1.bf16.msra.mxu0 0
        %1181 = vmatprep.subr.bf16.mxu0 0
        %1182 = vmatpush1.bf16.msra.mxu0 0
        %1183 = vmatprep.subr.bf16.mxu0 0
        %1184 = vmatpush1.bf16.msra.mxu0 0
        %1185 = vmatprep.subr.bf16.mxu0 0
        %1186 = vmatpush1.bf16.msra.mxu0 0
        %1187 = vmatprep.subr.bf16.mxu0 0
        %1188 = vmatpush1.bf16.msra.mxu0 0
        %1189 = vmatprep.subr.bf16.mxu0 0
        %1190 = vmatpush1.bf16.msra.mxu0 0
        %1191 = vmatprep.subr.bf16.mxu0 0
        %1192 = vmatpush1.bf16.msra.mxu0 0
        %1193 = vmatprep.subr.bf16.mxu0 0
        %1194 = vmatpush1.bf16.msra.mxu0 0
        %1195 = vmatprep.subr.bf16.mxu0 0
        %1196 = vmatpush1.bf16.msra.mxu0 0
        %1197 = vmatprep.subr.bf16.mxu0 0
        %1198 = vmatpush1.bf16.msra.mxu0 0
        %1199 = vmatprep.subr.bf16.mxu0 0
        %1200 = vmatpush1.bf16.msra.mxu0 0
        %1201 = vmatprep.subr.bf16.mxu0 0
        %1202 = vmatpush1.bf16.msra.mxu0 0
        %1203 = vmatprep.subr.bf16.mxu0 0
        %1204 = vmatpush1.bf16.msra.mxu0 0
        %1205 = vmatprep.subr.bf16.mxu0 0
        %1206 = vmatpush1.bf16.msra.mxu0 0
        %1207 = vmatprep.subr.bf16.mxu0 0
        %1208 = vmatpush1.bf16.msra.mxu0 0
        %1209 = vmatprep.mubr.bf16.mxu0 0
        %1210 = vmatmul.mubr.bf16.gmra.mrb[0].mxu0 %v1172
        %v1211 = vpop.f32.mrb[0].mxu0
        %v1212 = vadd.f32 0.0, %v1211
        %v1213 = vpop.f32.mrb[0].mxu0
        %v1214 = vpop.f32.mrb[0].mxu0
        %v1215 = vadd.f32 0.0, %v1214
        %v1216 = vpop.f32.mrb[0].mxu0
        %1217 = vdwg.mxu0
        %v1218 = vadd.f32 %v1043, %v1212
        %v1219 = vadd.f32 %v1044, %v1215
        %s1220 = scalar_lea.vmem %s5, %s25
        %v1221 = vld [vmem:[%s1220] sm:$0x1]
        %v1223 = vlaneseq
        %v1224 = vshrl.u32 %v1223, 7
        %v1225 = vsub.s32 0, %v1224
        %v1226 = vrot.slane %v1221, %v1225
        %v1228 = vadd.f32 %v1218, %v1226
        %v1229 = vadd.f32 %v1219, %v1226
        %s1230 = scalar_lea.vmem %s10, %s443
        %v1231 = vld [vmem:[%s1230] sm:$0xf]
        %v1232 = vadd.f32 %v417, %v1228
        %v1233 = vadd.f32 %v418, %v1229
        %v1234 = vsel %vm470, %v1232, 0.0
        %1235 = vadd.xlane.f32.xlu0 %v1234
        %v1236 = vpop.xlane.xlu0 %1235
        %v1237 = vsel %vm470, %v1233, 0.0
        %1238 = vadd.xlane.f32.xlu0 %v1237
        %v1239 = vpop.xlane.xlu0 %1238
        %v1240 = vrcp.pop 32.0
        %v1241 = vmul.f32 %v1236, %v1240
        %v1242 = vmul.f32 %v1239, %v1240
        %v1243 = vsub.f32 %v1232, %v1241
        %v1244 = vsub.f32 %v1233, %v1242
        %v1245 = vmul.f32 %v1243, %v1243
        %v1246 = vmul.f32 %v1244, %v1244
        %v1247 = vsel %vm470, %v1245, 0.0
        %1248 = vadd.xlane.f32.xlu0 %v1247
        %v1249 = vpop.xlane.xlu0 %1248
        %v1250 = vsel %vm470, %v1246, 0.0
        %1251 = vadd.xlane.f32.xlu0 %v1250
        %v1252 = vpop.xlane.xlu0 %1251
        %v1253 = vmul.f32 %v1249, %v1240
        %v1254 = vmul.f32 %v1252, %v1240
        %v1255 = vadd.f32 %v1253, 1e-05
        %v1256 = vadd.f32 %v1254, 1e-05
        %v1257 = vrsqrt.pop %v1255
        %v1258 = vrsqrt.pop %v1256
        %v1259 = vmul.f32 %v1243, %v1257
        %v1260 = vmul.f32 %v1244, %v1258
        %v1261 = vlaneseq
        %v1262 = vshrl.u32 %v1261, 7
        %v1263 = vsub.s32 0, %v1262
        %v1264 = vrot.slane %v1231, %v1263
        %v1265 = vmul.f32 %v1259, %v1264
        %v1266 = vmul.f32 %v1260, %v1264
        %v1267 = vlaneseq
        %v1268 = vshrl.u32 %v1267, 7
        %v1269 = vsub.s32 1, %v1268
        %v1270 = vrot.slane %v1231, %v1269
        %v1271 = vadd.f32 %v1265, %v1270
        %v1272 = vadd.f32 %v1266, %v1270
        %v1273 = vpack.c.bf16 %v1272, %v1271
        %s1274 = smul.addr %s443, 4
        %s1275 = scalar_lea.vmem %s6, %s1274
        %v1276 = vld [vmem:[%s1275] sm:$0xf]
        %v1277 = vld [vmem:[%s1275 + $0x4] sm:$0xf]
        %v1278 = vld [vmem:[%s1275 + $0x8] sm:$0xf]
        %v1279 = vld [vmem:[%s1275 + $0xc] sm:$0xf]
        %s1280 = scalar_lea.vmem %s7, %s25
        %v1281 = vld [vmem:[%s1280] sm:$0x1]
        %v1283 = vlaneseq
        %v1284 = vshrl.u32 %v1283, 7
        %v1285 = vsub.s32 0, %v1284
        %v1286 = vrot.slane %v1281, %v1285
        %v1292 = vunpack.c.l.b16 %v1276
        %v1293 = vunpack.c.l.b16 %v1277
        %v1294 = vunpack.c.l.b16 %v1278
        %v1295 = vunpack.c.l.b16 %v1279
        %v1296 = vpack.c.b16 %v1293, %v1292
        %v1297 = vpack.c.b16 %v1295, %v1294
        %v1301 = vsel %vm470, %v1273, 0
        %1303 = vmatprep.subr.bf16.mxu0 0
        %1304 = vmatpush1.bf16.msra.mxu0 %v1296
        %1305 = vmatprep.subr.bf16.mxu0 0
        %1306 = vmatpush1.bf16.msra.mxu0 %v1297
        %1307 = vmatprep.subr.bf16.mxu0 0
        %1308 = vmatpush1.bf16.msra.mxu0 0
        %1309 = vmatprep.subr.bf16.mxu0 0
        %1310 = vmatpush1.bf16.msra.mxu0 0
        %1311 = vmatprep.subr.bf16.mxu0 0
        %1312 = vmatpush1.bf16.msra.mxu0 0
        %1313 = vmatprep.subr.bf16.mxu0 0
        %1314 = vmatpush1.bf16.msra.mxu0 0
        %1315 = vmatprep.subr.bf16.mxu0 0
        %1316 = vmatpush1.bf16.msra.mxu0 0
        %1317 = vmatprep.subr.bf16.mxu0 0
        %1318 = vmatpush1.bf16.msra.mxu0 0
        %1319 = vmatprep.subr.bf16.mxu0 0
        %1320 = vmatpush1.bf16.msra.mxu0 0
        %1321 = vmatprep.subr.bf16.mxu0 0
        %1322 = vmatpush1.bf16.msra.mxu0 0
        %1323 = vmatprep.subr.bf16.mxu0 0
        %1324 = vmatpush1.bf16.msra.mxu0 0
        %1325 = vmatprep.subr.bf16.mxu0 0
        %1326 = vmatpush1.bf16.msra.mxu0 0
        %1327 = vmatprep.subr.bf16.mxu0 0
        %1328 = vmatpush1.bf16.msra.mxu0 0
        %1329 = vmatprep.subr.bf16.mxu0 0
        %1330 = vmatpush1.bf16.msra.mxu0 0
        %1331 = vmatprep.subr.bf16.mxu0 0
        %1332 = vmatpush1.bf16.msra.mxu0 0
        %1333 = vmatprep.subr.bf16.mxu0 0
        %1334 = vmatpush1.bf16.msra.mxu0 0
        %1335 = vmatprep.mubr.bf16.mxu0 0
        %1336 = vmatmul.mubr.bf16.gmra.mrb[0].mxu0 %v1301
        %v1337 = vpop.f32.mrb[0].mxu0
        %v1338 = vadd.f32 %v1286, %v1337
        %v1339 = vpop.f32.mrb[0].mxu0
        %v1340 = vpop.f32.mrb[0].mxu0
        %v1341 = vadd.f32 %v1286, %v1340
        %v1342 = vpop.f32.mrb[0].mxu0
        %1343 = vdwg.mxu0
        %v1344 = vmul.f32 %v1338, %v1338
        %v1345 = vmul.f32 %v1341, %v1341
        %v1346 = vmul.f32 %v1338, %v1344
        %v1347 = vmul.f32 %v1341, %v1345
        %v1348 = vmul.f32 %v1346, 0.044715
        %v1349 = vmul.f32 %v1347, 0.044715
        %v1350 = vadd.f32 %v1338, %v1348
        %v1351 = vadd.f32 %v1341, %v1349
        %v1352 = vmul.f32 %v1350, 0.7978846
        %v1353 = vmul.f32 %v1351, 0.7978846
        %v1354 = vtanh.pop %v1352
        %v1355 = vtanh.pop %v1353
        %v1356 = vadd.f32 %v1354, 1.0
        %v1357 = vadd.f32 %v1355, 1.0
        %v1358 = vmul.f32 %v1356, 0.5
        %v1359 = vmul.f32 %v1357, 0.5
        %v1360 = vmul.f32 %v1338, %v1358
        %v1361 = vmul.f32 %v1341, %v1359
        %v1362 = vpack.c.bf16 %v1361, %v1360
        %s1363 = smul.u32 %s25, 8
        %s1364 = smul.addr %s1363, 4
        %s1365 = scalar_lea.vmem %s8, %s1364
        %v1366 = vld [vmem:[%s1365] sm:$0xf]
        %v1367 = vld [vmem:[%s1365 + $0x4] sm:$0xf]
        %v1368 = vld [vmem:[%s1365 + $0x8] sm:$0xf]
        %v1369 = vld [vmem:[%s1365 + $0xc] sm:$0xf]
        %v1370 = vld [vmem:[%s1365 + $0x10] sm:$0xf]
        %v1371 = vld [vmem:[%s1365 + $0x14] sm:$0xf]
        %v1372 = vld [vmem:[%s1365 + $0x18] sm:$0xf]
        %v1373 = vld [vmem:[%s1365 + $0x1c] sm:$0xf]
        %s1374 = scalar_lea.vmem %s9, %s25
        %v1375 = vld [vmem:[%s1374] sm:$0x1]
        %v1377 = vlaneseq
        %v1378 = vshrl.u32 %v1377, 7
        %v1379 = vsub.s32 0, %v1378
        %v1380 = vrot.slane %v1375, %v1379
        %v1390 = vunpack.c.l.b16 %v1366
        %v1391 = vunpack.c.l.b16 %v1367
        %v1392 = vunpack.c.l.b16 %v1368
        %v1393 = vunpack.c.l.b16 %v1369
        %v1394 = vunpack.c.l.b16 %v1370
        %v1395 = vunpack.c.l.b16 %v1371
        %v1396 = vunpack.c.l.b16 %v1372
        %v1397 = vunpack.c.l.b16 %v1373
        %v1398 = vpack.c.b16 %v1391, %v1390
        %v1399 = vpack.c.b16 %v1393, %v1392
        %v1400 = vpack.c.b16 %v1395, %v1394
        %v1401 = vpack.c.b16 %v1397, %v1396
        %vm1406 = vcmask 523264
        %v1408 = vsel %vm1406, %v1362, 0
        %1410 = vmatprep.subr.bf16.mxu0 0
        %1411 = vmatpush1.bf16.msra.mxu0 %v1398
        %1412 = vmatprep.subr.bf16.mxu0 0
        %1413 = vmatpush1.bf16.msra.mxu0 %v1399
        %1414 = vmatprep.subr.bf16.mxu0 0
        %1415 = vmatpush1.bf16.msra.mxu0 %v1400
        %1416 = vmatprep.subr.bf16.mxu0 0
        %1417 = vmatpush1.bf16.msra.mxu0 %v1401
        %1418 = vmatprep.subr.bf16.mxu0 0
        %1419 = vmatpush1.bf16.msra.mxu0 0
        %1420 = vmatprep.subr.bf16.mxu0 0
        %1421 = vmatpush1.bf16.msra.mxu0 0
        %1422 = vmatprep.subr.bf16.mxu0 0
        %1423 = vmatpush1.bf16.msra.mxu0 0
        %1424 = vmatprep.subr.bf16.mxu0 0
        %1425 = vmatpush1.bf16.msra.mxu0 0
        %1426 = vmatprep.subr.bf16.mxu0 0
        %1427 = vmatpush1.bf16.msra.mxu0 0
        %1428 = vmatprep.subr.bf16.mxu0 0
        %1429 = vmatpush1.bf16.msra.mxu0 0
        %1430 = vmatprep.subr.bf16.mxu0 0
        %1431 = vmatpush1.bf16.msra.mxu0 0
        %1432 = vmatprep.subr.bf16.mxu0 0
        %1433 = vmatpush1.bf16.msra.mxu0 0
        %1434 = vmatprep.subr.bf16.mxu0 0
        %1435 = vmatpush1.bf16.msra.mxu0 0
        %1436 = vmatprep.subr.bf16.mxu0 0
        %1437 = vmatpush1.bf16.msra.mxu0 0
        %1438 = vmatprep.subr.bf16.mxu0 0
        %1439 = vmatpush1.bf16.msra.mxu0 0
        %1440 = vmatprep.subr.bf16.mxu0 0
        %1441 = vmatpush1.bf16.msra.mxu0 0
        %1442 = vmatprep.mubr.bf16.mxu0 0
        %1443 = vmatmul.mubr.bf16.gmra.mrb[0].mxu0 %v1408
        %v1444 = vpop.f32.mrb[0].mxu0
        %v1445 = vadd.f32 %v1380, %v1444
        %v1446 = vpop.f32.mrb[0].mxu0
        %v1447 = vpop.f32.mrb[0].mxu0
        %v1448 = vadd.f32 %v1380, %v1447
        %v1449 = vpop.f32.mrb[0].mxu0
        %1450 = vdwg.mxu0
        %v1451 = vadd.f32 %v1271, %v1445
        %v1452 = vadd.f32 %v1272, %v1448
        %v1453 = vsel %vm470, %v1451, 0.0
        %1454 = vadd.xlane.f32.xlu0 %v1453
        %v1455 = vpop.xlane.xlu0 %1454
        %v1456 = vsel %vm470, %v1452, 0.0
        %1457 = vadd.xlane.f32.xlu0 %v1456
        %v1458 = vpop.xlane.xlu0 %1457
        %v1459 = vmul.f32 %v1455, %v1240
        %v1460 = vmul.f32 %v1458, %v1240
        %v1461 = vsub.f32 %v1451, %v1459
        %v1462 = vsub.f32 %v1452, %v1460
        %v1463 = vmul.f32 %v1461, %v1461
        %v1464 = vmul.f32 %v1462, %v1462
        %v1465 = vsel %vm470, %v1463, 0.0
        %1466 = vadd.xlane.f32.xlu0 %v1465
        %v1467 = vpop.xlane.xlu0 %1466
        %v1468 = vsel %vm470, %v1464, 0.0
        %1469 = vadd.xlane.f32.xlu0 %v1468
        %v1470 = vpop.xlane.xlu0 %1469
        %v1471 = vmul.f32 %v1467, %v1240
        %v1472 = vmul.f32 %v1470, %v1240
        %v1473 = vadd.f32 %v1471, 1e-05
        %v1474 = vadd.f32 %v1472, 1e-05
        %v1475 = vrsqrt.pop %v1473
        %v1476 = vrsqrt.pop %v1474
        %v1477 = vmul.f32 %v1461, %v1475
        %v1478 = vmul.f32 %v1462, %v1476
        %v1479 = vlaneseq
        %v1480 = vshrl.u32 %v1479, 7
        %v1481 = vsub.s32 2, %v1480
        %v1482 = vrot.slane %v1231, %v1481
        %v1483 = vmul.f32 %v1477, %v1482
        %v1484 = vmul.f32 %v1478, %v1482
        %v1485 = vlaneseq
        %v1486 = vshrl.u32 %v1485, 7
        %v1487 = vsub.s32 3, %v1486
        %v1488 = vrot.slane %v1231, %v1487
        %v1489 = vadd.f32 %v1483, %v1488
        %v1490 = vadd.f32 %v1484, %v1488
        %1491 = vst.msk [vmem:[#allocation2] sm:$0xff] %vm470, %v1489
        %1492 = vst.msk [vmem:[#allocation2 + $0x8] sm:$0xff] %vm470, %v1490
        %p1493 = scmp.eq.s32.totalorder %s25, 1
        // Predicated region
        $region77: #{router_classifier_forward.1} parent=71 // pred_check
          %p1494 = pneg %p1493
        $region78: #{router_classifier_forward.1} parent=71 // pred_check_branch
          %1496 = sbr.rel (%p1494) target = $region80
        $region79: #{router_classifier_forward.1} parent=71 // pred_region
          %v1497 = vmul.u32 %v421, 8
          %vm1498 = vcmp.eq.s32.totalorder %v424, %v1497
          %v1499 = vsel %vm1498, 1, 0
          %v1500 = vcvt.s32.f32 %v1499
          %v1501 = vpack.c.bf16 %v1500, %v1500
          %v1502 = vpack.c.bf16 %v1490, %v1489
          %v1504 = vsel %vm577, %v1501, 0
          %1506 = vmatprep.subr.bf16.mxu0 0
          %1507 = vmatpush1.bf16.msra.mxu0 %v1502
          %1508 = vmatprep.subr.bf16.mxu0 0
          %1509 = vmatpush1.bf16.msra.mxu0 0
          %1510 = vmatprep.subr.bf16.mxu0 0
          %1511 = vmatpush1.bf16.msra.mxu0 0
          %1512 = vmatprep.subr.bf16.mxu0 0
          %1513 = vmatpush1.bf16.msra.mxu0 0
          %1514 = vmatprep.subr.bf16.mxu0 0
          %1515 = vmatpush1.bf16.msra.mxu0 0
          %1516 = vmatprep.subr.bf16.mxu0 0
          %1517 = vmatpush1.bf16.msra.mxu0 0
          %1518 = vmatprep.subr.bf16.mxu0 0
          %1519 = vmatpush1.bf16.msra.mxu0 0
          %1520 = vmatprep.subr.bf16.mxu0 0
          %1521 = vmatpush1.bf16.msra.mxu0 0
          %1522 = vmatprep.subr.bf16.mxu0 0
          %1523 = vmatpush1.bf16.msra.mxu0 0
          %1524 = vmatprep.subr.bf16.mxu0 0
          %1525 = vmatpush1.bf16.msra.mxu0 0
          %1526 = vmatprep.subr.bf16.mxu0 0
          %1527 = vmatpush1.bf16.msra.mxu0 0
          %1528 = vmatprep.subr.bf16.mxu0 0
          %1529 = vmatpush1.bf16.msra.mxu0 0
          %1530 = vmatprep.subr.bf16.mxu0 0
          %1531 = vmatpush1.bf16.msra.mxu0 0
          %1532 = vmatprep.subr.bf16.mxu0 0
          %1533 = vmatpush1.bf16.msra.mxu0 0
          %1534 = vmatprep.subr.bf16.mxu0 0
          %1535 = vmatpush1.bf16.msra.mxu0 0
          %1536 = vmatprep.subr.bf16.mxu0 0
          %1537 = vmatpush1.bf16.msra.mxu0 0
          %1538 = vmatprep.mubr.bf16.mxu0 0
          %1539 = vmatmul.mubr.bf16.gmra.mrb[0].mxu0 %v1504
          %v1540 = vpop.f32.mrb[0].mxu0
          %v1541 = vadd.f32 0.0, %v1540
          %v1542 = vpop.f32.mrb[0].mxu0
          %v1543 = vpop.f32.mrb[0].mxu0
          %v1544 = vpop.f32.mrb[0].mxu0
          %1545 = vdwg.mxu0
          %v1546 = vpack.c.bf16 %v1541, %v1541
          %v1547 = vld [vmem:[%s11] sm:$0xf]
          %v1548 = vld [vmem:[%s11 + $0x4] sm:$0xf]
          %v1549 = vld [vmem:[%s11 + $0x8] sm:$0xf]
          %v1550 = vld [vmem:[%s11 + $0xc] sm:$0xf]
          %v1551 = vld [vmem:[%s12] sm:$0x1]
          %v1553 = vlaneseq
          %v1554 = vshrl.u32 %v1553, 7
          %v1555 = vsub.s32 0, %v1554
          %v1556 = vrot.slane %v1551, %v1555
          %v1562 = vunpack.c.l.b16 %v1547
          %v1563 = vunpack.c.l.b16 %v1548
          %v1564 = vunpack.c.l.b16 %v1549
          %v1565 = vunpack.c.l.b16 %v1550
          %v1566 = vpack.c.b16 %v1563, %v1562
          %v1567 = vpack.c.b16 %v1565, %v1564
          %v1571 = vsel %vm470, %v1546, 0
          %1573 = vmatprep.subr.bf16.mxu0 0
          %1574 = vmatpush1.bf16.msra.mxu0 %v1566
          %1575 = vmatprep.subr.bf16.mxu0 0
          %1576 = vmatpush1.bf16.msra.mxu0 %v1567
          %1577 = vmatprep.subr.bf16.mxu0 0
          %1578 = vmatpush1.bf16.msra.mxu0 0
          %1579 = vmatprep.subr.bf16.mxu0 0
          %1580 = vmatpush1.bf16.msra.mxu0 0
          %1581 = vmatprep.subr.bf16.mxu0 0
          %1582 = vmatpush1.bf16.msra.mxu0 0
          %1583 = vmatprep.subr.bf16.mxu0 0
          %1584 = vmatpush1.bf16.msra.mxu0 0
          %1585 = vmatprep.subr.bf16.mxu0 0
          %1586 = vmatpush1.bf16.msra.mxu0 0
          %1587 = vmatprep.subr.bf16.mxu0 0
          %1588 = vmatpush1.bf16.msra.mxu0 0
          %1589 = vmatprep.subr.bf16.mxu0 0
          %1590 = vmatpush1.bf16.msra.mxu0 0
          %1591 = vmatprep.subr.bf16.mxu0 0
          %1592 = vmatpush1.bf16.msra.mxu0 0
          %1593 = vmatprep.subr.bf16.mxu0 0
          %1594 = vmatpush1.bf16.msra.mxu0 0
          %1595 = vmatprep.subr.bf16.mxu0 0
          %1596 = vmatpush1.bf16.msra.mxu0 0
          %1597 = vmatprep.subr.bf16.mxu0 0
          %1598 = vmatpush1.bf16.msra.mxu0 0
          %1599 = vmatprep.subr.bf16.mxu0 0
          %1600 = vmatpush1.bf16.msra.mxu0 0
          %1601 = vmatprep.subr.bf16.mxu0 0
          %1602 = vmatpush1.bf16.msra.mxu0 0
          %1603 = vmatprep.subr.bf16.mxu0 0
          %1604 = vmatpush1.bf16.msra.mxu0 0
          %1605 = vmatprep.mubr.bf16.mxu0 0
          %1606 = vmatmul.mubr.bf16.gmra.mrb[0].mxu0 %v1571
          %v1607 = vpop.f32.mrb[0].mxu0
          %v1608 = vadd.f32 %v1556, %v1607
          %v1609 = vpop.f32.mrb[0].mxu0
          %v1610 = vpop.f32.mrb[0].mxu0
          %v1611 = vpop.f32.mrb[0].mxu0
          %1612 = vdwg.mxu0
          %v1613 = vmul.f32 %v1608, 0.5
          %1614 = vst [vmem:[#allocation3] sm:$0x3] %v1613
        $region80: #{router_classifier_forward.1} parent=71 // pred_fallthru
          _
        // Predicated region
        $region81: #{router_classifier_forward.1} parent=71 // pred_check
          %p1615 = pneg %p311
        $region82: #{router_classifier_forward.1} parent=71 // pred_check_branch
          %1617 = sbr.rel (%p1615) target = $region84
        $region83: #{router_classifier_forward.1} parent=71 // pred_region
          %s1619 = ssub.s32 32, 32
          %1620 = vsyncadd [#allocation4], %s1619
          %s1622 = sshll.u32 [#allocation3], 4
          %s1623 = int_to_ptr.vmem [resolvable:$true] %s1622
          %1625 = dma.vmem_to_hbm [thread:$0]  %s1623, 32, %s13, [#allocation4]
        $region84: #{router_classifier_forward.1} parent=71 // pred_fallthru
          _
        // Predicated region
        $region85: #{router_classifier_forward.1} parent=71 // pred_check
          %p1626 = pneg %p311
        $region86: #{router_classifier_forward.1} parent=71 // pred_check_branch
          %1628 = sbr.rel (%p1626) target = $region88
        $region87: #{router_classifier_forward.1} parent=71 // pred_region
          %1629 = dma.done [#allocation4], 32
        $region88: #{router_classifier_forward.1} parent=71 // pred_fallthru
          _
      $region72: #{router_classifier_forward.1} parent=5 // pred_fallthru
        _
      %p1630 = scmp.le.s32.totalorder 2, %s20
      // Predicated region
      $region89: #{router_classifier_forward.1} parent=5 // pred_check
        %p1631 = pneg %p1630
      $region90: #{router_classifier_forward.1} parent=5 // pred_check_branch
        %1633 = sbr.rel (%p1631) target = $region92
      $region91: #{router_classifier_forward.1} parent=5 // pred_region
        %s1634 = ssub.s32 %s20, 2
      $region92: #{router_classifier_forward.1} parent=5 // pred_fallthru
        _
    $region6: #{router_classifier_forward.1} parent=1 // loop_footer
      %s24 = sadd.s32 1, %s20
    $region7: #{router_classifier_forward.1} parent=1 // loop_footer_branch
      %19 = sbr.rel target = $region3
    $region8: #{router_classifier_forward.1} parent=1 // loop_exit
      _
    %1635 = vsyncpa [#allocation4], 1
    %s1636 = scalar_lea.sflag [#allocation4], 1
    %1637 = vsyncpa %s1636, 1

</llo_original>
